<compile_context>
chip_gen: v7x
topology: tpu7x:2x2x1
jax: 0.10.0
libtpu: 0.0.40
codegen_flags: <defaults>
</compile_context>

<pallas_src>
import functools

import jax
import jax.numpy as jnp
from jax import lax
from jax.experimental import pallas as pl
from jax.experimental.pallas import tpu as pltpu


def _vmem_cap_bytes():
    phys = 64 * 2**20                      # conservative default (v7x per-TC)
    try:
        info = pltpu.get_tpu_info()
        cap = getattr(info, "vmem_capacity_bytes", None)
        if cap:
            phys = int(cap)
    except Exception:
        pass
    return max(32 * 2**20, (phys * 3) // 4)


def _emission_kernel(body_ref, halo_ref, w1_ref, b1_ref, w2_ref, b2_ref, o_ref,
                     *, k, pad, precision):
    # body_ref : (C_in, Lt)        activations, channels on sublanes, L on lanes
    # halo_ref : (C_in, 2*pad)     [left halo | right halo] columns for this tile
    # w1_ref   : (C_in, k*C_in)    w1_flat[o, t*C_in + i] = conv1.weight[o, i, t]
    # b1_ref   : (C_in, 1)  f32
    # w2_ref   : (C_out, C_in)     conv2.weight[:, :, 0]
    # b2_ref   : (C_out, 1) f32
    # o_ref    : (C_out, Lt)       lane-dense output block
    Lt = body_ref.shape[-1]
    x = body_ref[...]
    if pad > 0:
        halo = halo_ref[...]
        win = jnp.concatenate([halo[:, :pad], x, halo[:, pad:]], axis=-1)  # (C_in, Lt+2*pad)
    else:
        win = x
    if k > 1:
        # im2col along sublanes: one tall-K matmul instead of k accumulator RMWs.
        taps = jnp.concatenate([win[:, t:t + Lt] for t in range(k)], axis=0)  # (k*C_in, Lt)
    else:
        taps = win
    acc = jnp.dot(w1_ref[...], taps, precision=precision,
                  preferred_element_type=jnp.float32)                         # (C_in, Lt) f32
    h = jnp.maximum(acc + b1_ref[...], 0.0)                                   # bias + ReLU, f32
    y = jnp.dot(w2_ref[...], h.astype(w2_ref.dtype), precision=precision,
                preferred_element_type=jnp.float32) + b2_ref[...]             # (C_out, Lt) f32
    o_ref[...] = y.astype(o_ref.dtype)


def emission_layer_pallas(x_bcl, w1_flat, b1, w2, b2, kernel_size, *,
                          compute_dtype=jnp.bfloat16, out_dtype=None, lt_max=None):
    """x_bcl: (B, C_in, L) channels-first.  Returns (B, C_out, L) channels-first."""
    B, C_in, L = x_bcl.shape
    k = int(kernel_size)
    assert k % 2 == 1, "EmissionLayer requires odd kernel_size (matches the PyTorch assert)"
    pad = k // 2
    C_out = w2.shape[0]
    if out_dtype is None:
        out_dtype = x_bcl.dtype
    cd_b = jnp.dtype(compute_dtype).itemsize
    ob = jnp.dtype(out_dtype).itemsize

    # ---- tile sizing: one (C_in, Lt) slab per grid step, as large as ~20 MiB allows ----
    per_elem = (2 * C_in * cd_b            # double-buffered input block
                + 2 * C_out * ob           # double-buffered output block
                + (k + 1) * C_in * cd_b    # win + im2col taps temporaries
                + 4 * C_in + 4 * C_out)    # f32 acc / y temporaries
    lt_cap = max(128, (int((20 * 2**20) // per_elem) // 128) * 128)
    if lt_max is not None:
        lt_cap = min(lt_cap, max(128, (int(lt_max) // 128) * 128))
    if L <= lt_cap:
        Lt, T = L, 1                       # single tile: block == full L dim
    else:
        T = -(-L // lt_cap)
        Lt = ((-(-L // T)) + 127) // 128 * 128   # multiple of 128 for the lane dim
    L_al = T * Lt

    # ---- host prep: cast (+ tail alignment pad) and the tiny per-tile halo gather ----
    body = x_bcl.astype(compute_dtype)
    if L_al > L:
        body = jnp.pad(body, ((0, 0), (0, 0), (0, L_al - L)))

    hw = max(2 * pad, 1)
    if pad > 0:
        offs = jnp.concatenate([jnp.arange(-pad, 0), jnp.arange(Lt, Lt + pad)])  # (2*pad,)
        col = (jnp.arange(T) * Lt)[:, None] + offs[None, :]                      # (T, 2*pad)
        valid = (col >= 0) & (col < L)
        colc = jnp.clip(col, 0, L_al - 1).reshape(-1)
        halo = jnp.take(body, colc, axis=2)                                      # (B, C_in, T*2*pad)
        halo = jnp.where(valid.reshape(-1)[None, None, :], halo,
                         jnp.zeros((), compute_dtype))
        halo = halo.reshape(B, C_in, T, 2 * pad).transpose(0, 2, 1, 3)            # (B, T, C_in, 2*pad)
    else:
        halo = jnp.zeros((B, T, C_in, hw), compute_dtype)

    w1c = w1_flat.astype(compute_dtype)   # (C_in, k*C_in)
    w2c = w2.astype(compute_dtype)        # (C_out, C_in)
    b1f = b1.astype(jnp.float32)          # (C_in, 1)
    b2f = b2.astype(jnp.float32)          # (C_out, 1)

    # ---- VMEM budget, capped per generation ----
    est = ((2 * C_in * Lt + 2 * C_in * hw + (k + 1) * C_in * Lt) * cd_b
           + 2 * C_out * Lt * ob
           + (C_in * Lt + C_out * Lt) * 4
           + (k * C_in * C_in + C_out * C_in) * cd_b + 4 * (C_in + C_out)
           + (1 << 20))
    vmem_limit = int(min(max(2 * est, 32 * 2**20), _vmem_cap_bytes()))

    precision = (lax.Precision.HIGHEST
                 if jnp.dtype(compute_dtype) == jnp.dtype(jnp.float32)
                 else lax.Precision.DEFAULT)
    kernel = functools.partial(_emission_kernel, k=k, pad=pad, precision=precision)

    out = pl.pallas_call(
        kernel,
        out_shape=jax.ShapeDtypeStruct((B, C_out, L_al), out_dtype),
        grid_spec=pltpu.PrefetchScalarGridSpec(
            num_scalar_prefetch=0,
            grid=(B, T),
            in_specs=[
                pl.BlockSpec((None, C_in, Lt), lambda b, t: (b, 0, t)),       # body slab
                pl.BlockSpec((None, None, C_in, hw), lambda b, t: (b, t, 0, 0)),  # halo cols
                pl.BlockSpec((C_in, k * C_in), lambda b, t: (0, 0)),          # w1 (resident)
                pl.BlockSpec((C_in, 1), lambda b, t: (0, 0)),                 # b1
                pl.BlockSpec((C_out, C_in), lambda b, t: (0, 0)),             # w2
                pl.BlockSpec((C_out, 1), lambda b, t: (0, 0)),                # b2
            ],
            out_specs=pl.BlockSpec((None, C_out, Lt), lambda b, t: (b, 0, t)),
        ),
        compiler_params=pltpu.CompilerParams(
            dimension_semantics=("parallel", "parallel"),
            vmem_limit_bytes=vmem_limit,
        ),
    )(body, halo, w1c, b1f, w2c, b2f)

    return out[:, :, :L]


def emission_layer_forward(inp, params, kernel_size, batch_first=False,
                           compute_dtype=jnp.bfloat16, out_dtype=None, lt_max=None):
    """Matches EmissionLayer.forward.

    batch_first=False: inp (seq, batch, in_size) -> out (seq, batch, out_size)
    batch_first=True : inp (batch, seq, in_size) -> out (batch, seq, out_size)
    """
    w1_flat, b1, w2, b2 = params
    # Module's permute to channels-first (the only host layout pass; folds with cast/pad).
    x_bcl = jnp.transpose(inp, (0, 2, 1)) if batch_first else jnp.transpose(inp, (1, 2, 0))
    y_bcl = emission_layer_pallas(x_bcl, w1_flat, b1, w2, b2, kernel_size,
                                  compute_dtype=compute_dtype, out_dtype=out_dtype,
                                  lt_max=lt_max)
    return jnp.transpose(y_bcl, (0, 2, 1)) if batch_first else jnp.transpose(y_bcl, (2, 0, 1))


def init_params(key, in_size, out_size, kernel_size):
    """Deterministic synthetic parameters (PyTorch shapes + kernel layout).

    PyTorch: conv1.weight (in, in, k), conv1.bias (in,)
             conv2.weight (out, in, 1), conv2.bias (out,)
    Kernel layout (channels-on-sublanes):
             w1_flat (in, k*in)  with  w1_flat[o, t*in + i] = conv1.weight[o, i, t]
             b1 (in, 1), w2 (out, in) = conv2.weight[:, :, 0], b2 (out, 1)
    """
    k1, k2, k3, k4 = jax.random.split(key, 4)
    conv1_w = jax.random.normal(k1, (in_size, in_size, kernel_size), jnp.float32) * 0.1
    conv1_b = jax.random.normal(k2, (in_size,), jnp.float32) * 0.1
    conv2_w = jax.random.normal(k3, (out_size, in_size, 1), jnp.float32) * 0.1
    conv2_b = jax.random.normal(k4, (out_size,), jnp.float32) * 0.1

    w1_flat = jnp.transpose(conv1_w, (0, 2, 1)).reshape(in_size, kernel_size * in_size)
    b1 = conv1_b.reshape(in_size, 1)
    w2 = conv2_w[:, :, 0]
    b2 = conv2_b.reshape(out_size, 1)
    return (w1_flat, b1, w2, b2), (conv1_w, conv1_b, conv2_w, conv2_b)


def reference_forward(inp, torch_params, kernel_size, batch_first=False):
    """Pure-JAX reference mimicking the PyTorch module exactly (f32)."""
    conv1_w, conv1_b, conv2_w, conv2_b = torch_params
    pad = kernel_size // 2
    x = jnp.transpose(inp, (0, 2, 1)) if batch_first else jnp.transpose(inp, (1, 2, 0))
    y = jax.lax.conv_general_dilated(
        x, conv1_w, window_strides=(1,), padding=[(pad, pad)],
        dimension_numbers=("NCH", "OIH", "NCH"))
    y = jnp.maximum(y + conv1_b[None, :, None], 0.0)
    y = jax.lax.conv_general_dilated(
        y, conv2_w, window_strides=(1,), padding=[(0, 0)],
        dimension_numbers=("NCH", "OIH", "NCH"))
    y = y + conv2_b[None, :, None]
    return jnp.transpose(y, (0, 2, 1)) if batch_first else jnp.transpose(y, (2, 0, 1))


if __name__ == "__main__":
    in_size, out_size, kernel_size = 32, 8, 3
    seq_len, batch = 8, 2

    key = jax.random.PRNGKey(0)
    pkey, xkey, xkey2 = jax.random.split(key, 3)
    params, torch_params = init_params(pkey, in_size, out_size, kernel_size)

    # --- batch_first=False path: input is (seq, batch, in_size) ---
    x = jax.random.normal(xkey, (seq_len, batch, in_size), jnp.float32)
    ref = reference_forward(x, torch_params, kernel_size, batch_first=False)

    # f32 compute path: tight against the XLA reference.
    out_f32 = jax.block_until_ready(
        emission_layer_forward(x, params, kernel_size, batch_first=False,
                               compute_dtype=jnp.float32))
    assert out_f32.shape == (seq_len, batch, out_size), out_f32.shape
    assert jnp.allclose(out_f32, ref, atol=1e-3, rtol=1e-3), float(
        jnp.max(jnp.abs(out_f32 - ref)))

    # Default fast path: bf16 inputs/weights, f32 accumulation.
    out_bf16 = jax.block_until_ready(
        emission_layer_forward(x, params, kernel_size, batch_first=False))
    assert out_bf16.shape == (seq_len, batch, out_size), out_bf16.shape
    assert jnp.allclose(out_bf16, ref, atol=5e-2, rtol=5e-2), float(
        jnp.max(jnp.abs(out_bf16 - ref)))

    # --- multi-tile path (forces Lt=128, T>1): exercises halos + tail padding, batch_first=True ---
    seq2, batch2 = 300, 2
    x2 = jax.random.normal(xkey2, (batch2, seq2, in_size), jnp.float32)
    ref2 = reference_forward(x2, torch_params, kernel_size, batch_first=True)
    out2 = jax.block_until_ready(
        emission_layer_forward(x2, params, kernel_size, batch_first=True,
                               compute_dtype=jnp.float32, lt_max=128))
    assert out2.shape == (batch2, seq2, out_size), out2.shape
    assert jnp.allclose(out2, ref2, atol=1e-3, rtol=1e-3), float(
        jnp.max(jnp.abs(out2 - ref2)))

    print("KERNEL_OK")
</pallas_src>

<mosaic_0001>
module attributes {stable_mosaic.version = 11 : i64} {
  func.func @_emission_kernel(%arg0: i32, %arg1: i32, %arg2: memref<1x32x8xf32, #tpu.memory_space<vmem>>, %arg3: memref<1x1x32x2xf32, #tpu.memory_space<vmem>>, %arg4: memref<32x96xf32, #tpu.memory_space<vmem>>, %arg5: memref<32x1xf32, #tpu.memory_space<vmem>>, %arg6: memref<8x32xf32, #tpu.memory_space<vmem>>, %arg7: memref<8x1xf32, #tpu.memory_space<vmem>>, %arg8: memref<1x8x8xf32, #tpu.memory_space<vmem>>) attributes {dimension_semantics = [#tpu.dimension_semantics<parallel>, #tpu.dimension_semantics<parallel>], iteration_bounds = array<i64: 2, 1>, scalar_prefetch = 0 : i64, scratch_operands = 0 : i64, tpu.core_type = #tpu.core_type<tc>, window_params = [{transform_indices = @transform_0, window_bounds = array<i64: 1, 32, 8>}, {transform_indices = @transform_1, window_bounds = array<i64: 1, 1, 32, 2>}, {pipeline_mode = #tpu.pipeline_mode<synchronous>, transform_indices = @transform_2, window_bounds = array<i64: 32, 96>}, {pipeline_mode = #tpu.pipeline_mode<synchronous>, transform_indices = @transform_3, window_bounds = array<i64: 32, 1>}, {pipeline_mode = #tpu.pipeline_mode<synchronous>, transform_indices = @transform_4, window_bounds = array<i64: 8, 32>}, {pipeline_mode = #tpu.pipeline_mode<synchronous>, transform_indices = @transform_5, window_bounds = array<i64: 8, 1>}, {transform_indices = @transform_6, window_bounds = array<i64: 1, 8, 8>}]} {
    %c0 = arith.constant 0 : index
    %c0_0 = arith.constant 0 : index
    %c0_1 = arith.constant 0 : index
    %0 = vector.load %arg2[%c0, %c0_0, %c0_1] : memref<1x32x8xf32, #tpu.memory_space<vmem>>, vector<1x32x8xf32>
    %1 = vector.shape_cast %0 : vector<1x32x8xf32> to vector<32x8xf32>
    %c0_2 = arith.constant 0 : index
    %c0_3 = arith.constant 0 : index
    %c0_4 = arith.constant 0 : index
    %c0_5 = arith.constant 0 : index
    %2 = vector.load %arg3[%c0_2, %c0_3, %c0_4, %c0_5] : memref<1x1x32x2xf32, #tpu.memory_space<vmem>>, vector<1x1x32x2xf32>
    %3 = vector.shape_cast %2 : vector<1x1x32x2xf32> to vector<32x2xf32>
    %4 = vector.extract_strided_slice %3 {offsets = [0, 0], sizes = [32, 1], strides = [1, 1]} : vector<32x2xf32> to vector<32x1xf32>
    %5 = vector.extract_strided_slice %3 {offsets = [0, 1], sizes = [32, 1], strides = [1, 1]} : vector<32x2xf32> to vector<32x1xf32>
    %6 = tpu.concatenate %4, %1, %5 in 1 : vector<32x1xf32>, vector<32x8xf32>, vector<32x1xf32> -> vector<32x10xf32>
    %7 = vector.extract_strided_slice %6 {offsets = [0, 0], sizes = [32, 8], strides = [1, 1]} : vector<32x10xf32> to vector<32x8xf32>
    %8 = vector.extract_strided_slice %6 {offsets = [0, 1], sizes = [32, 8], strides = [1, 1]} : vector<32x10xf32> to vector<32x8xf32>
    %9 = vector.extract_strided_slice %6 {offsets = [0, 2], sizes = [32, 8], strides = [1, 1]} : vector<32x10xf32> to vector<32x8xf32>
    %10 = tpu.concatenate %7, %8, %9 in 0 : vector<32x8xf32>, vector<32x8xf32>, vector<32x8xf32> -> vector<96x8xf32>
    %c0_6 = arith.constant 0 : index
    %c0_7 = arith.constant 0 : index
    %11 = vector.load %arg4[%c0_6, %c0_7] : memref<32x96xf32, #tpu.memory_space<vmem>>, vector<32x96xf32>
    %cst = arith.constant dense<0.000000e+00> : vector<32x8xf32>
    %12 = tpu.matmul %11, %10, %cst {dimension_numbers = #tpu.dot_dimension_numbers<[1], [0], [0], [1], [0, 0, 1, 1], [], []>, precision = #tpu.contract_precision<fp32>} : vector<32x96xf32>, vector<96x8xf32>, vector<32x8xf32> -> vector<32x8xf32>
    %c0_8 = arith.constant 0 : index
    %c0_9 = arith.constant 0 : index
    %13 = vector.load %arg5[%c0_8, %c0_9] : memref<32x1xf32, #tpu.memory_space<vmem>>, vector<32x1xf32>
    %14 = vector.broadcast %13 : vector<32x1xf32> to vector<32x8xf32>
    %15 = arith.addf %12, %14 : vector<32x8xf32>
    %cst_10 = arith.constant 0.000000e+00 : f32
    %16 = vector.broadcast %cst_10 : f32 to vector<32x8xf32>
    %17 = arith.maximumf %15, %16 : vector<32x8xf32>
    %c0_11 = arith.constant 0 : index
    %c0_12 = arith.constant 0 : index
    %18 = vector.load %arg6[%c0_11, %c0_12] : memref<8x32xf32, #tpu.memory_space<vmem>>, vector<8x32xf32>
    %cst_13 = arith.constant dense<0.000000e+00> : vector<8x8xf32>
    %19 = tpu.matmul %18, %17, %cst_13 {dimension_numbers = #tpu.dot_dimension_numbers<[1], [0], [0], [1], [0, 0, 1, 1], [], []>, precision = #tpu.contract_precision<fp32>} : vector<8x32xf32>, vector<32x8xf32>, vector<8x8xf32> -> vector<8x8xf32>
    %c0_14 = arith.constant 0 : index
    %c0_15 = arith.constant 0 : index
    %20 = vector.load %arg7[%c0_14, %c0_15] : memref<8x1xf32, #tpu.memory_space<vmem>>, vector<8x1xf32>
    %21 = vector.broadcast %20 : vector<8x1xf32> to vector<8x8xf32>
    %22 = arith.addf %19, %21 : vector<8x8xf32>
    %c0_16 = arith.constant 0 : index
    %c0_17 = arith.constant 0 : index
    %c0_18 = arith.constant 0 : index
    %23 = vector.load %arg8[%c0_16, %c0_17, %c0_18] : memref<1x8x8xf32, #tpu.memory_space<vmem>>, vector<1x8x8xf32>
    %24 = vector.shape_cast %23 : vector<1x8x8xf32> to vector<8x8xf32>
    %25 = vector.shape_cast %22 : vector<8x8xf32> to vector<1x8x8xf32>
    tpu.vector_store %arg8[%c0_16, %c0_17, %c0_18], %25 {strides = array<i32>} : memref<1x8x8xf32, #tpu.memory_space<vmem>>, vector<1x8x8xf32>,
    return
  }
  func.func @transform_0(%arg0: i32, %arg1: i32) -> (i32, i32, i32) {
    %c0_i32 = arith.constant 0 : i32
    %c0_i32_0 = arith.constant 0 : i32
    return %arg0, %c0_i32, %arg1 : i32, i32, i32
  }
  func.func @transform_1(%arg0: i32, %arg1: i32) -> (i32, i32, i32, i32) {
    %c0_i32 = arith.constant 0 : i32
    %c0_i32_0 = arith.constant 0 : i32
    %c0_i32_1 = arith.constant 0 : i32
    return %arg0, %arg1, %c0_i32, %c0_i32_0 : i32, i32, i32, i32
  }
  func.func @transform_2(%arg0: i32, %arg1: i32) -> (i32, i32) {
    %c0_i32 = arith.constant 0 : i32
    %c0_i32_0 = arith.constant 0 : i32
    %c0_i32_1 = arith.constant 0 : i32
    return %c0_i32, %c0_i32_0 : i32, i32
  }
  func.func @transform_3(%arg0: i32, %arg1: i32) -> (i32, i32) {
    %c0_i32 = arith.constant 0 : i32
    %c0_i32_0 = arith.constant 0 : i32
    %c0_i32_1 = arith.constant 0 : i32
    return %c0_i32, %c0_i32_0 : i32, i32
  }
  func.func @transform_4(%arg0: i32, %arg1: i32) -> (i32, i32) {
    %c0_i32 = arith.constant 0 : i32
    %c0_i32_0 = arith.constant 0 : i32
    %c0_i32_1 = arith.constant 0 : i32
    return %c0_i32, %c0_i32_0 : i32, i32
  }
  func.func @transform_5(%arg0: i32, %arg1: i32) -> (i32, i32) {
    %c0_i32 = arith.constant 0 : i32
    %c0_i32_0 = arith.constant 0 : i32
    %c0_i32_1 = arith.constant 0 : i32
    return %c0_i32, %c0_i32_0 : i32, i32
  }
  func.func @transform_6(%arg0: i32, %arg1: i32) -> (i32, i32, i32) {
    %c0_i32 = arith.constant 0 : i32
    %c0_i32_0 = arith.constant 0 : i32
    return %arg0, %c0_i32, %arg1 : i32, i32, i32
  }
}

</mosaic_0001>

<llo_original>
// kernel: tpu_custom_call.1
$region0: #{tpu_custom_call.1}
  #allocation0 [shape = 'u32[]', space=smem, size = 0x4, offset = 0x4, fixed_abs, tag = 'smem constant byte address 0x4 - core index']
  #allocation1 [shape = 'u32[144,128]{1,0:T(1,128)}', space=vmem, size = 0x12000, scoped, tag = 'internal scratch']
  %s0 = inlined_call_operand.vmem [shape: f32[2,32,8], index: 0, kind: input, shape index: {}]
  %s1 = inlined_call_operand.vmem [shape: f32[2,1,32,2], index: 1, kind: input, shape index: {}]
  %s2 = inlined_call_operand.vmem [shape: f32[32,96], index: 2, kind: input, shape index: {}]
  %s3 = inlined_call_operand.vmem [shape: f32[32,1], index: 3, kind: input, shape index: {}]
  %s4 = inlined_call_operand.vmem [shape: f32[8,32], index: 4, kind: input, shape index: {}]
  %s5 = inlined_call_operand.vmem [shape: f32[8,1], index: 5, kind: input, shape index: {}]
  %s6 = inlined_call_operand.hbm [shape: f32[2,8,8], index: 6, kind: output, shape index: {}]
  %s7 = sld [smem:[#allocation0]]
  $region57: #{tpu_custom_call.1} parent=0
    _
  %s9 = ssub.s32 1, %s7
  %s10 = scalar_select 0, %s9, %s7
  $region1: #{tpu_custom_call.1} parent=0
    #allocation2 [shape = 'u8[8192]{0}', space=vmem, size = 0x2000, scoped, tag = 'output window, operand 0']
    #allocation3 [shape = 's32[2]{0}', space=sflag, size = 0x8, scoped, tag = 'scoped memory for tpu_custom_call.1']
    %11 = vsyncpa [#allocation3], 0
    %s12 = scalar_lea.sflag [#allocation3], 1
    %13 = vsyncpa %s12, 0
    loop: start=0, step=1, limit=4
    $region2: #{tpu_custom_call.1} parent=1 // loop_pre_header
      _
    $region3: #{tpu_custom_call.1} parent=1 // loop_header
      %s15 = sphi 0, %s19
      %p16 = scmp.ge.s32.totalorder %s15, 4
      %s22 = sphi 0, %s34
      %s23 = sphi 0, %s30
      %s24 = sphi 0, %s22
      %s25 = sphi 0, %s23
      %s26 = sphi 0, %s24
      %s27 = sphi 0, %s25
      %s39 = sphi 0, %s41
      %s42 = sphi 0, %s39
      %s43 = sphi 0, %s42
      %s59 = sphi 0, %s43
      %s67 = sphi 0, %s69
      %s70 = sphi 0, %s67
      %s71 = sphi 0, %s70
      %s87 = sphi 0, %s71
      %s91 = sphi 0, %s91
      %s93 = sphi 0, %s91
      %s94 = sphi 0, %s93
      %s108 = sphi 0, %s94
      %s112 = sphi 0, %s112
      %s114 = sphi 0, %s112
      %s115 = sphi 0, %s114
      %s129 = sphi 0, %s115
      %s133 = sphi 0, %s133
      %s135 = sphi 0, %s133
      %s136 = sphi 0, %s135
      %s150 = sphi 0, %s136
      %s154 = sphi 0, %s154
      %s156 = sphi 0, %s154
      %s157 = sphi 0, %s156
      %s171 = sphi 0, %s157
      %s179 = sphi 0, %s181
      %s182 = sphi 0, %s179
      %s183 = sphi 0, %s182
      %s199 = sphi 0, %s183
    $region4: #{tpu_custom_call.1} parent=1 // loop_header_branch
      %18 = sbr.rel (%p16) target = $region8
    $region5: #{tpu_custom_call.1} parent=1 // loop_body
      %s20 = ssub.s32 %s15, 1
      %s21 = ssub.s32 %s15, 2
      %s28 = sadd.s32 1, %s23
      %p29 = scmp.ge.s32.totalorder %s28, 1
      %s30 = scalar_select %p29, 0, %s28
      %s31 = sadd.s32 1, %s22
      %s32 = scalar_select %p29, %s31, %s22
      %p33 = scmp.ge.s32.totalorder %s32, 2
      %s34 = scalar_select %p33, 0, %s32
      %s35 = ssub.s32 %s22, %s34
      %s36 = ssub.s32 %s23, %s30
      %s37 = sor.u32 %s35, %s36
      %p38 = scmp.eq.s32.totalorder %s37, 0
      %s40 = sadd.s32 %s39, 1
      %s41 = scalar_select %p38, %s39, %s40
      %p44 = pneg %p38
      %p45 = scmp.eq.s32.totalorder %s15, 1
      %p46 = por %p44, %p45
      %p47 = scmp.ne.s32.totalorder %s39, %s42
      %p48 = scmp.eq.s32.totalorder %s15, 0
      %p49 = por %p47, %p48
      %p50 = scmp.ne.s32.totalorder %s39, %s42
      %p51 = scmp.eq.s32.totalorder %s20, 1
      %p52 = por %p50, %p51
      %p53 = scmp.ne.s32.totalorder %s42, %s43
      %p54 = scmp.eq.s32.totalorder %s20, 0
      %p55 = por %p53, %p54
      %p56 = scmp.ne.s32.totalorder %s42, %s43
      %p57 = scmp.eq.s32.totalorder %s21, 1
      %p58 = por %p56, %p57
      %p60 = scmp.ne.s32.totalorder %s43, %s59
      %p61 = scmp.eq.s32.totalorder %s21, 0
      %p62 = por %p60, %p61
      %s63 = ssub.s32 %s22, %s34
      %s64 = ssub.s32 %s23, %s30
      %s65 = sor.u32 %s63, %s64
      %p66 = scmp.eq.s32.totalorder %s65, 0
      %s68 = sadd.s32 %s67, 1
      %s69 = scalar_select %p66, %s67, %s68
      %p72 = pneg %p66
      %p73 = scmp.eq.s32.totalorder %s15, 1
      %p74 = por %p72, %p73
      %p75 = scmp.ne.s32.totalorder %s67, %s70
      %p76 = scmp.eq.s32.totalorder %s15, 0
      %p77 = por %p75, %p76
      %p78 = scmp.ne.s32.totalorder %s67, %s70
      %p79 = scmp.eq.s32.totalorder %s20, 1
      %p80 = por %p78, %p79
      %p81 = scmp.ne.s32.totalorder %s70, %s71
      %p82 = scmp.eq.s32.totalorder %s20, 0
      %p83 = por %p81, %p82
      %p84 = scmp.ne.s32.totalorder %s70, %s71
      %p85 = scmp.eq.s32.totalorder %s21, 1
      %p86 = por %p84, %p85
      %p88 = scmp.ne.s32.totalorder %s71, %s87
      %p89 = scmp.eq.s32.totalorder %s21, 0
      %p90 = por %p88, %p89
      %s92 = sadd.s32 %s91, 1
      %p95 = scmp.eq.s32.totalorder %s15, 1
      %p96 = scmp.ne.s32.totalorder %s91, %s93
      %p97 = scmp.eq.s32.totalorder %s15, 0
      %p98 = por %p96, %p97
      %p99 = scmp.ne.s32.totalorder %s91, %s93
      %p100 = scmp.eq.s32.totalorder %s20, 1
      %p101 = por %p99, %p100
      %p102 = scmp.ne.s32.totalorder %s93, %s94
      %p103 = scmp.eq.s32.totalorder %s20, 0
      %p104 = por %p102, %p103
      %p105 = scmp.ne.s32.totalorder %s93, %s94
      %p106 = scmp.eq.s32.totalorder %s21, 1
      %p107 = por %p105, %p106
      %p109 = scmp.ne.s32.totalorder %s94, %s108
      %p110 = scmp.eq.s32.totalorder %s21, 0
      %p111 = por %p109, %p110
      %s113 = sadd.s32 %s112, 1
      %p116 = scmp.eq.s32.totalorder %s15, 1
      %p117 = scmp.ne.s32.totalorder %s112, %s114
      %p118 = scmp.eq.s32.totalorder %s15, 0
      %p119 = por %p117, %p118
      %p120 = scmp.ne.s32.totalorder %s112, %s114
      %p121 = scmp.eq.s32.totalorder %s20, 1
      %p122 = por %p120, %p121
      %p123 = scmp.ne.s32.totalorder %s114, %s115
      %p124 = scmp.eq.s32.totalorder %s20, 0
      %p125 = por %p123, %p124
      %p126 = scmp.ne.s32.totalorder %s114, %s115
      %p127 = scmp.eq.s32.totalorder %s21, 1
      %p128 = por %p126, %p127
      %p130 = scmp.ne.s32.totalorder %s115, %s129
      %p131 = scmp.eq.s32.totalorder %s21, 0
      %p132 = por %p130, %p131
      %s134 = sadd.s32 %s133, 1
      %p137 = scmp.eq.s32.totalorder %s15, 1
      %p138 = scmp.ne.s32.totalorder %s133, %s135
      %p139 = scmp.eq.s32.totalorder %s15, 0
      %p140 = por %p138, %p139
      %p141 = scmp.ne.s32.totalorder %s133, %s135
      %p142 = scmp.eq.s32.totalorder %s20, 1
      %p143 = por %p141, %p142
      %p144 = scmp.ne.s32.totalorder %s135, %s136
      %p145 = scmp.eq.s32.totalorder %s20, 0
      %p146 = por %p144, %p145
      %p147 = scmp.ne.s32.totalorder %s135, %s136
      %p148 = scmp.eq.s32.totalorder %s21, 1
      %p149 = por %p147, %p148
      %p151 = scmp.ne.s32.totalorder %s136, %s150
      %p152 = scmp.eq.s32.totalorder %s21, 0
      %p153 = por %p151, %p152
      %s155 = sadd.s32 %s154, 1
      %p158 = scmp.eq.s32.totalorder %s15, 1
      %p159 = scmp.ne.s32.totalorder %s154, %s156
      %p160 = scmp.eq.s32.totalorder %s15, 0
      %p161 = por %p159, %p160
      %p162 = scmp.ne.s32.totalorder %s154, %s156
      %p163 = scmp.eq.s32.totalorder %s20, 1
      %p164 = por %p162, %p163
      %p165 = scmp.ne.s32.totalorder %s156, %s157
      %p166 = scmp.eq.s32.totalorder %s20, 0
      %p167 = por %p165, %p166
      %p168 = scmp.ne.s32.totalorder %s156, %s157
      %p169 = scmp.eq.s32.totalorder %s21, 1
      %p170 = por %p168, %p169
      %p172 = scmp.ne.s32.totalorder %s157, %s171
      %p173 = scmp.eq.s32.totalorder %s21, 0
      %p174 = por %p172, %p173
      %s175 = ssub.s32 %s22, %s34
      %s176 = ssub.s32 %s23, %s30
      %s177 = sor.u32 %s175, %s176
      %p178 = scmp.eq.s32.totalorder %s177, 0
      %s180 = sadd.s32 %s179, 1
      %s181 = scalar_select %p178, %s179, %s180
      %p184 = pneg %p178
      %p185 = scmp.eq.s32.totalorder %s15, 1
      %p186 = por %p184, %p185
      %p187 = scmp.ne.s32.totalorder %s179, %s182
      %p188 = scmp.eq.s32.totalorder %s15, 0
      %p189 = por %p187, %p188
      %p190 = scmp.ne.s32.totalorder %s179, %s182
      %p191 = scmp.eq.s32.totalorder %s20, 1
      %p192 = por %p190, %p191
      %p193 = scmp.ne.s32.totalorder %s182, %s183
      %p194 = scmp.eq.s32.totalorder %s20, 0
      %p195 = por %p193, %p194
      %p196 = scmp.ne.s32.totalorder %s182, %s183
      %p197 = scmp.eq.s32.totalorder %s21, 1
      %p198 = por %p196, %p197
      %p200 = scmp.ne.s32.totalorder %s183, %s199
      %p201 = scmp.eq.s32.totalorder %s21, 0
      %p202 = por %p200, %p201
      %p203 = scmp.le.s32.totalorder 1, %s15
      %p204 = scmp.lt.s32.totalorder %s15, 3
      %p205 = pnand %p203, %p204
      %p206 = pneg %p205
      // Predicated region
      $region9: #{tpu_custom_call.1} parent=5 // pred_check
        _
      $region10: #{tpu_custom_call.1} parent=5 // pred_check_branch
        %208 = sbr.rel (%p205) target = $region12
      $region11: #{tpu_custom_call.1} parent=5 // pred_region
        %s209 = ssub.s32 %s15, 1
        // Predicated region
        $region13: #{tpu_custom_call.1} parent=11 // pred_check
          %p210 = pneg %p104
        $region14: #{tpu_custom_call.1} parent=11 // pred_check_branch
          %212 = sbr.rel (%p210) target = $region16
        $region15: #{tpu_custom_call.1} parent=11 // pred_region
          _
        $region16: #{tpu_custom_call.1} parent=11 // pred_fallthru
          _
        // Predicated region
        $region17: #{tpu_custom_call.1} parent=11 // pred_check
          %p213 = pneg %p125
        $region18: #{tpu_custom_call.1} parent=11 // pred_check_branch
          %215 = sbr.rel (%p213) target = $region20
        $region19: #{tpu_custom_call.1} parent=11 // pred_region
          _
        $region20: #{tpu_custom_call.1} parent=11 // pred_fallthru
          _
        // Predicated region
        $region21: #{tpu_custom_call.1} parent=11 // pred_check
          %p216 = pneg %p146
        $region22: #{tpu_custom_call.1} parent=11 // pred_check_branch
          %218 = sbr.rel (%p216) target = $region24
        $region23: #{tpu_custom_call.1} parent=11 // pred_region
          _
        $region24: #{tpu_custom_call.1} parent=11 // pred_fallthru
          _
        // Predicated region
        $region25: #{tpu_custom_call.1} parent=11 // pred_check
          %p219 = pneg %p167
        $region26: #{tpu_custom_call.1} parent=11 // pred_check_branch
          %221 = sbr.rel (%p219) target = $region28
        $region27: #{tpu_custom_call.1} parent=11 // pred_region
          _
        $region28: #{tpu_custom_call.1} parent=11 // pred_fallthru
          _
      $region12: #{tpu_custom_call.1} parent=5 // pred_fallthru
        _
      %p222 = scmp.lt.s32.totalorder %s15, 2
      // Predicated region
      $region29: #{tpu_custom_call.1} parent=5 // pred_check
        %p223 = pneg %p222
      $region30: #{tpu_custom_call.1} parent=5 // pred_check_branch
        %225 = sbr.rel (%p223) target = $region32
      $region31: #{tpu_custom_call.1} parent=5 // pred_region
        // Predicated region
        $region33: #{tpu_custom_call.1} parent=31 // pred_check
          %p226 = pneg %p49
        $region34: #{tpu_custom_call.1} parent=31 // pred_check_branch
          %228 = sbr.rel (%p226) target = $region36
        $region35: #{tpu_custom_call.1} parent=31 // pred_region
          %p229 = scmp.lt.s32.totalorder %s22, 1
          %s230 = scalar_select %p229, %s22, 1
          %p231 = scmp.lt.s32.totalorder %s23, 0
          %s232 = scalar_select %p231, %s23, 0
          %s233 = smul.addr %s230, 4
          %s234 = sadd.s32 %s232, %s233
          %s235 = smul.addr %s234, 8
          %s236 = scalar_lea.vmem %s0, %s235
        $region36: #{tpu_custom_call.1} parent=31 // pred_fallthru
          _
        // Predicated region
        $region37: #{tpu_custom_call.1} parent=31 // pred_check
          %p237 = pneg %p77
        $region38: #{tpu_custom_call.1} parent=31 // pred_check_branch
          %239 = sbr.rel (%p237) target = $region40
        $region39: #{tpu_custom_call.1} parent=31 // pred_region
          %p240 = scmp.lt.s32.totalorder %s22, 1
          %s241 = scalar_select %p240, %s22, 1
          %p242 = scmp.lt.s32.totalorder %s23, 0
          %s243 = scalar_select %p242, %s23, 0
          %s244 = smul.addr %s243, 4
          %s245 = smul.addr %s241, 4
          %s246 = sadd.s32 %s244, %s245
          %s247 = smul.addr %s246, 8
          %s248 = scalar_lea.vmem %s1, %s247
        $region40: #{tpu_custom_call.1} parent=31 // pred_fallthru
          _
      $region32: #{tpu_custom_call.1} parent=5 // pred_fallthru
        _
      %p249 = scmp.le.s32.totalorder 1, %s15
      %p250 = scmp.lt.s32.totalorder %s15, 3
      %p251 = pnand %p249, %p250
      %p252 = pneg %p251
      // Predicated region
      $region41: #{tpu_custom_call.1} parent=5 // pred_check
        _
      $region42: #{tpu_custom_call.1} parent=5 // pred_check_branch
        %254 = sbr.rel (%p251) target = $region44
      $region43: #{tpu_custom_call.1} parent=5 // pred_region
        %s255 = ssub.s32 %s15, 1
        %p256 = scmp.lt.s32.totalorder %s24, 1
        %s257 = scalar_select %p256, %s24, 1
        %p258 = scmp.lt.s32.totalorder %s25, 0
        %s259 = scalar_select %p258, %s25, 0
        %s260 = smul.addr %s257, 4
        %s261 = sadd.s32 %s259, %s260
        %s262 = smul.addr %s261, 8
        %s263 = scalar_lea.vmem %s0, %s262
        %p264 = pneg %p55
        %p265 = pneg %p52
        %p266 = scmp.lt.s32.totalorder %s24, 1
        %s267 = scalar_select %p266, %s24, 1
        %p268 = scmp.lt.s32.totalorder %s25, 0
        %s269 = scalar_select %p268, %s25, 0
        %s270 = smul.addr %s269, 4
        %s271 = smul.addr %s267, 4
        %s272 = sadd.s32 %s270, %s271
        %s273 = smul.addr %s272, 8
        %s274 = scalar_lea.vmem %s1, %s273
        %p275 = pneg %p83
        %p276 = pneg %p80
        %p277 = pneg %p104
        %p278 = pneg %p101
        %p279 = pneg %p125
        %p280 = pneg %p122
        %p281 = pneg %p146
        %p282 = pneg %p143
        %p283 = pneg %p167
        %p284 = pneg %p164
        %p285 = pneg %p195
        %p286 = pneg %p192
        %s287 = sand.u32 %s182, 1
        %s288 = scalar_lea.sflag [#allocation3], %s287
        %s289 = sand.u32 %s182, 1
        %s290 = smul.addr %s289, 8
        %s291 = scalar_lea.vmem [#allocation2], %s290
        %p292 = scmp.lt.s32.totalorder %s24, 1
        %s293 = scalar_select %p292, %s24, 1
        %p294 = scmp.lt.s32.totalorder %s25, 0
        %s295 = scalar_select %p294, %s25, 0
        %s296 = smul.addr %s293, 4
        %s297 = sadd.s32 %s295, %s296
        %s298 = smul.addr %s297, 8
        %s299 = scalar_lea.vmem %s0, %s298
        %p300 = scmp.lt.s32.totalorder %s24, 1
        %s301 = scalar_select %p300, %s24, 1
        %p302 = scmp.lt.s32.totalorder %s25, 0
        %s303 = scalar_select %p302, %s25, 0
        %s304 = smul.addr %s303, 4
        %s305 = smul.addr %s301, 4
        %s306 = sadd.s32 %s304, %s305
        %s307 = smul.addr %s306, 8
        %s308 = scalar_lea.vmem %s1, %s307
        %v309 = vld [vmem:[%s299] sm:$0xff]
        %v310 = vld [vmem:[%s299 + $0x8] sm:$0xff]
        %v311 = vld [vmem:[%s299 + $0x10] sm:$0xff]
        %v312 = vld [vmem:[%s299 + $0x18] sm:$0xff]
        %v313 = vld [vmem:[%s308] sm:$0xff]
        %v314 = vld [vmem:[%s308 + $0x8] sm:$0xff]
        %v315 = vld [vmem:[%s308 + $0x10] sm:$0xff]
        %v316 = vld [vmem:[%s308 + $0x18] sm:$0xff]
        %321 = vrot.lane.b32.xlu0 %v309, 1
        %v322 = vpop.permute.xlu0 %321
        %323 = vrot.lane.b32.xlu0 %v310, 1
        %v324 = vpop.permute.xlu0 %323
        %325 = vrot.lane.b32.xlu0 %v311, 1
        %v326 = vpop.permute.xlu0 %325
        %327 = vrot.lane.b32.xlu0 %v312, 1
        %v328 = vpop.permute.xlu0 %327
        %337 = vrot.lane.b32.xlu0 %v313, 8
        %v338 = vpop.permute.xlu0 %337
        %339 = vrot.lane.b32.xlu0 %v314, 8
        %v340 = vpop.permute.xlu0 %339
        %341 = vrot.lane.b32.xlu0 %v315, 8
        %v342 = vpop.permute.xlu0 %341
        %343 = vrot.lane.b32.xlu0 %v316, 8
        %v344 = vpop.permute.xlu0 %343
        %vm349 = vcmask 7168
        %v350 = vsel %vm349, %v313, %v322
        %v351 = vsel %vm349, %v314, %v324
        %v352 = vsel %vm349, %v315, %v326
        %v353 = vsel %vm349, %v316, %v328
        %vm354 = vcmask 72704
        %v355 = vsel %vm354, %v350, %v338
        %v356 = vsel %vm354, %v351, %v340
        %v357 = vsel %vm354, %v352, %v342
        %v358 = vsel %vm354, %v353, %v344
        %363 = vrot.lane.b32.xlu0 %v355, 127
        %v364 = vpop.permute.xlu0 %363
        %365 = vrot.lane.b32.xlu0 %v356, 127
        %v366 = vpop.permute.xlu0 %365
        %367 = vrot.lane.b32.xlu0 %v357, 127
        %v368 = vpop.permute.xlu0 %367
        %369 = vrot.lane.b32.xlu0 %v358, 127
        %v370 = vpop.permute.xlu0 %369
        %375 = vrot.lane.b32.xlu0 %v355, 126
        %v376 = vpop.permute.xlu0 %375
        %377 = vrot.lane.b32.xlu0 %v356, 126
        %v378 = vpop.permute.xlu0 %377
        %379 = vrot.lane.b32.xlu0 %v357, 126
        %v380 = vpop.permute.xlu0 %379
        %381 = vrot.lane.b32.xlu0 %v358, 126
        %v382 = vpop.permute.xlu0 %381
        %v387 = vld [vmem:[%s2] sm:$0xff]
        %v388 = vld [vmem:[%s2 + $0x8] sm:$0xff]
        %v389 = vld [vmem:[%s2 + $0x10] sm:$0xff]
        %v390 = vld [vmem:[%s2 + $0x18] sm:$0xff]
        %v391 = vld [vmem:[%s3] sm:$0xff]
        %v392 = vld [vmem:[%s3 + $0x8] sm:$0xff]
        %v393 = vld [vmem:[%s3 + $0x10] sm:$0xff]
        %v394 = vld [vmem:[%s3 + $0x18] sm:$0xff]
        %396 = vset.pattern.permute.xlu0 0
        %397 = vperm.xlu0 %396, %v391
        %v398 = vpop.permute.xlu0 %397
        %401 = vset.pattern.permute.xlu0 0
        %402 = vperm.xlu0 %401, %v392
        %v403 = vpop.permute.xlu0 %402
        %406 = vset.pattern.permute.xlu0 0
        %407 = vperm.xlu0 %406, %v393
        %v408 = vpop.permute.xlu0 %407
        %411 = vset.pattern.permute.xlu0 0
        %412 = vperm.xlu0 %411, %v394
        %v413 = vpop.permute.xlu0 %412
        %vm415 = vcmask 785408
        %v417 = vsel %vm415, %v387, 0
        %v420 = vsel %vm415, %v388, 0
        %v423 = vsel %vm415, %v389, 0
        %v426 = vsel %vm415, %v390, 0
        %428 = vmatprep.subr.mxu0 0.0
        %v429 = vand.u32 %v355, 4294901760
        %430 = vmatpush1.msra.mxu0 %v429
        %431 = vmatprep.subr.mxu0 0.0
        %v432 = vand.u32 %v356, 4294901760
        %433 = vmatpush1.msra.mxu0 %v432
        %434 = vmatprep.subr.mxu0 0.0
        %v435 = vand.u32 %v357, 4294901760
        %436 = vmatpush1.msra.mxu0 %v435
        %437 = vmatprep.subr.mxu0 0.0
        %v438 = vand.u32 %v358, 4294901760
        %439 = vmatpush1.msra.mxu0 %v438
        %440 = vmatprep.subr.mxu0 0.0
        %v441 = vand.u32 %v364, 4294901760
        %442 = vmatpush1.msra.mxu0 %v441
        %443 = vmatprep.subr.mxu0 0.0
        %v444 = vand.u32 %v366, 4294901760
        %445 = vmatpush1.msra.mxu0 %v444
        %446 = vmatprep.subr.mxu0 0.0
        %v447 = vand.u32 %v368, 4294901760
        %448 = vmatpush1.msra.mxu0 %v447
        %449 = vmatprep.subr.mxu0 0.0
        %v450 = vand.u32 %v370, 4294901760
        %451 = vmatpush1.msra.mxu0 %v450
        %452 = vmatprep.subr.mxu0 0.0
        %v453 = vand.u32 %v376, 4294901760
        %454 = vmatpush1.msra.mxu0 %v453
        %455 = vmatprep.subr.mxu0 0.0
        %v456 = vand.u32 %v378, 4294901760
        %457 = vmatpush1.msra.mxu0 %v456
        %458 = vmatprep.subr.mxu0 0.0
        %v459 = vand.u32 %v380, 4294901760
        %460 = vmatpush1.msra.mxu0 %v459
        %461 = vmatprep.subr.mxu0 0.0
        %v462 = vand.u32 %v382, 4294901760
        %463 = vmatpush1.msra.mxu0 %v462
        %464 = vmatprep.subr.mxu0 0.0
        %465 = vmatpush1.msra.mxu0 0.0
        %466 = vmatprep.subr.mxu0 0.0
        %467 = vmatpush1.msra.mxu0 0.0
        %468 = vmatprep.subr.mxu0 0.0
        %469 = vmatpush1.msra.mxu0 0.0
        %470 = vmatprep.subr.mxu0 0.0
        %471 = vmatpush1.msra.mxu0 0.0
        %472 = vmatprep.subr.mxu0 0.0
        %473 = vmatpush1.msra.mxu0 0.0
        %474 = vmatprep.subr.mxu0 0.0
        %475 = vmatpush1.msra.mxu0 0.0
        %476 = vmatprep.subr.mxu0 0.0
        %477 = vmatpush1.msra.mxu0 0.0
        %478 = vmatprep.subr.mxu0 0.0
        %479 = vmatpush1.msra.mxu0 0.0
        %480 = vmatprep.subr.mxu0 0.0
        %481 = vmatpush1.msra.mxu0 0.0
        %482 = vmatprep.subr.mxu0 0.0
        %483 = vmatpush1.msra.mxu0 0.0
        %484 = vmatprep.subr.mxu0 0.0
        %485 = vmatpush1.msra.mxu0 0.0
        %486 = vmatprep.subr.mxu0 0.0
        %487 = vmatpush1.msra.mxu0 0.0
        %488 = vmatprep.subr.mxu0 0.0
        %489 = vmatpush1.msra.mxu0 0.0
        %490 = vmatprep.subr.mxu0 0.0
        %491 = vmatpush1.msra.mxu0 0.0
        %492 = vmatprep.subr.mxu0 0.0
        %493 = vmatpush1.msra.mxu0 0.0
        %494 = vmatprep.subr.mxu0 0.0
        %495 = vmatpush1.msra.mxu0 0.0
        %496 = vmatprep.subr.mxu0 0.0
        %497 = vmatpush1.msra.mxu0 0.0
        %498 = vmatprep.subr.mxu0 0.0
        %499 = vmatpush1.msra.mxu0 0.0
        %500 = vmatprep.subr.mxu0 0.0
        %501 = vmatpush1.msra.mxu0 0.0
        %502 = vmatprep.subr.mxu0 0.0
        %503 = vmatpush1.msra.mxu0 0.0
        %504 = vmatprep.mubr.f32.mxu0 0.0
        %v505 = vand.u32 %v417, 4294901760
        %v506 = vsub.f32 %v417, %v505
        %v507 = vand.u32 %v506, 4294901760
        %v508 = vsub.f32 %v506, %v507
        %v509 = vand.u32 %v508, 4294901760
        %510 = vmatmul.mubr.f32.gmra.mrb[0].mxu0 %v509
        %v511 = vpop.f32.mrb[0].mxu0
        %v512 = vadd.f32 %v398, %v511
        %v513 = vpop.f32.mrb[0].mxu0
        %514 = vmatprep.mubr.f32.mxu0 0.0
        %v515 = vand.u32 %v420, 4294901760
        %v516 = vsub.f32 %v420, %v515
        %v517 = vand.u32 %v516, 4294901760
        %v518 = vsub.f32 %v516, %v517
        %v519 = vand.u32 %v518, 4294901760
        %520 = vmatmul.mubr.f32.gmra.mrb[0].mxu0 %v519
        %v521 = vpop.f32.mrb[0].mxu0
        %v522 = vadd.f32 %v403, %v521
        %v523 = vpop.f32.mrb[0].mxu0
        %524 = vmatprep.mubr.f32.mxu0 0.0
        %v525 = vand.u32 %v423, 4294901760
        %v526 = vsub.f32 %v423, %v525
        %v527 = vand.u32 %v526, 4294901760
        %v528 = vsub.f32 %v526, %v527
        %v529 = vand.u32 %v528, 4294901760
        %530 = vmatmul.mubr.f32.gmra.mrb[0].mxu0 %v529
        %v531 = vpop.f32.mrb[0].mxu0
        %v532 = vadd.f32 %v408, %v531
        %v533 = vpop.f32.mrb[0].mxu0
        %534 = vmatprep.mubr.f32.mxu0 0.0
        %v535 = vand.u32 %v426, 4294901760
        %v536 = vsub.f32 %v426, %v535
        %v537 = vand.u32 %v536, 4294901760
        %v538 = vsub.f32 %v536, %v537
        %v539 = vand.u32 %v538, 4294901760
        %540 = vmatmul.mubr.f32.gmra.mrb[0].mxu0 %v539
        %v541 = vpop.f32.mrb[0].mxu0
        %v542 = vadd.f32 %v413, %v541
        %v543 = vpop.f32.mrb[0].mxu0
        %544 = vdwg.mxu0
        %545 = vmatprep.subr.mxu0 0.0
        %v546 = vand.u32 %v355, 4294901760
        %v547 = vsub.f32 %v355, %v546
        %v548 = vand.u32 %v547, 4294901760
        %v549 = vsub.f32 %v547, %v548
        %v550 = vand.u32 %v549, 4294901760
        %551 = vmatpush1.msra.mxu0 %v550
        %552 = vmatprep.subr.mxu0 0.0
        %v553 = vand.u32 %v356, 4294901760
        %v554 = vsub.f32 %v356, %v553
        %v555 = vand.u32 %v554, 4294901760
        %v556 = vsub.f32 %v554, %v555
        %v557 = vand.u32 %v556, 4294901760
        %558 = vmatpush1.msra.mxu0 %v557
        %559 = vmatprep.subr.mxu0 0.0
        %v560 = vand.u32 %v357, 4294901760
        %v561 = vsub.f32 %v357, %v560
        %v562 = vand.u32 %v561, 4294901760
        %v563 = vsub.f32 %v561, %v562
        %v564 = vand.u32 %v563, 4294901760
        %565 = vmatpush1.msra.mxu0 %v564
        %566 = vmatprep.subr.mxu0 0.0
        %v567 = vand.u32 %v358, 4294901760
        %v568 = vsub.f32 %v358, %v567
        %v569 = vand.u32 %v568, 4294901760
        %v570 = vsub.f32 %v568, %v569
        %v571 = vand.u32 %v570, 4294901760
        %572 = vmatpush1.msra.mxu0 %v571
        %573 = vmatprep.subr.mxu0 0.0
        %v574 = vand.u32 %v364, 4294901760
        %v575 = vsub.f32 %v364, %v574
        %v576 = vand.u32 %v575, 4294901760
        %v577 = vsub.f32 %v575, %v576
        %v578 = vand.u32 %v577, 4294901760
        %579 = vmatpush1.msra.mxu0 %v578
        %580 = vmatprep.subr.mxu0 0.0
        %v581 = vand.u32 %v366, 4294901760
        %v582 = vsub.f32 %v366, %v581
        %v583 = vand.u32 %v582, 4294901760
        %v584 = vsub.f32 %v582, %v583
        %v585 = vand.u32 %v584, 4294901760
        %586 = vmatpush1.msra.mxu0 %v585
        %587 = vmatprep.subr.mxu0 0.0
        %v588 = vand.u32 %v368, 4294901760
        %v589 = vsub.f32 %v368, %v588
        %v590 = vand.u32 %v589, 4294901760
        %v591 = vsub.f32 %v589, %v590
        %v592 = vand.u32 %v591, 4294901760
        %593 = vmatpush1.msra.mxu0 %v592
        %594 = vmatprep.subr.mxu0 0.0
        %v595 = vand.u32 %v370, 4294901760
        %v596 = vsub.f32 %v370, %v595
        %v597 = vand.u32 %v596, 4294901760
        %v598 = vsub.f32 %v596, %v597
        %v599 = vand.u32 %v598, 4294901760
        %600 = vmatpush1.msra.mxu0 %v599
        %601 = vmatprep.subr.mxu0 0.0
        %v602 = vand.u32 %v376, 4294901760
        %v603 = vsub.f32 %v376, %v602
        %v604 = vand.u32 %v603, 4294901760
        %v605 = vsub.f32 %v603, %v604
        %v606 = vand.u32 %v605, 4294901760
        %607 = vmatpush1.msra.mxu0 %v606
        %608 = vmatprep.subr.mxu0 0.0
        %v609 = vand.u32 %v378, 4294901760
        %v610 = vsub.f32 %v378, %v609
        %v611 = vand.u32 %v610, 4294901760
        %v612 = vsub.f32 %v610, %v611
        %v613 = vand.u32 %v612, 4294901760
        %614 = vmatpush1.msra.mxu0 %v613
        %615 = vmatprep.subr.mxu0 0.0
        %v616 = vand.u32 %v380, 4294901760
        %v617 = vsub.f32 %v380, %v616
        %v618 = vand.u32 %v617, 4294901760
        %v619 = vsub.f32 %v617, %v618
        %v620 = vand.u32 %v619, 4294901760
        %621 = vmatpush1.msra.mxu0 %v620
        %622 = vmatprep.subr.mxu0 0.0
        %v623 = vand.u32 %v382, 4294901760
        %v624 = vsub.f32 %v382, %v623
        %v625 = vand.u32 %v624, 4294901760
        %v626 = vsub.f32 %v624, %v625
        %v627 = vand.u32 %v626, 4294901760
        %628 = vmatpush1.msra.mxu0 %v627
        %629 = vmatprep.subr.mxu0 0.0
        %630 = vmatpush1.msra.mxu0 0.0
        %631 = vmatprep.subr.mxu0 0.0
        %632 = vmatpush1.msra.mxu0 0.0
        %633 = vmatprep.subr.mxu0 0.0
        %634 = vmatpush1.msra.mxu0 0.0
        %635 = vmatprep.subr.mxu0 0.0
        %636 = vmatpush1.msra.mxu0 0.0
        %637 = vmatprep.subr.mxu0 0.0
        %638 = vmatpush1.msra.mxu0 0.0
        %639 = vmatprep.subr.mxu0 0.0
        %640 = vmatpush1.msra.mxu0 0.0
        %641 = vmatprep.subr.mxu0 0.0
        %642 = vmatpush1.msra.mxu0 0.0
        %643 = vmatprep.subr.mxu0 0.0
        %644 = vmatpush1.msra.mxu0 0.0
        %645 = vmatprep.subr.mxu0 0.0
        %646 = vmatpush1.msra.mxu0 0.0
        %647 = vmatprep.subr.mxu0 0.0
        %648 = vmatpush1.msra.mxu0 0.0
        %649 = vmatprep.subr.mxu0 0.0
        %650 = vmatpush1.msra.mxu0 0.0
        %651 = vmatprep.subr.mxu0 0.0
        %652 = vmatpush1.msra.mxu0 0.0
        %653 = vmatprep.subr.mxu0 0.0
        %654 = vmatpush1.msra.mxu0 0.0
        %655 = vmatprep.subr.mxu0 0.0
        %656 = vmatpush1.msra.mxu0 0.0
        %657 = vmatprep.subr.mxu0 0.0
        %658 = vmatpush1.msra.mxu0 0.0
        %659 = vmatprep.subr.mxu0 0.0
        %660 = vmatpush1.msra.mxu0 0.0
        %661 = vmatprep.subr.mxu0 0.0
        %662 = vmatpush1.msra.mxu0 0.0
        %663 = vmatprep.subr.mxu0 0.0
        %664 = vmatpush1.msra.mxu0 0.0
        %665 = vmatprep.subr.mxu0 0.0
        %666 = vmatpush1.msra.mxu0 0.0
        %667 = vmatprep.subr.mxu0 0.0
        %668 = vmatpush1.msra.mxu0 0.0
        %669 = vmatprep.mubr.f32.mxu0 0.0
        %v670 = vand.u32 %v417, 4294901760
        %671 = vmatmul.mubr.f32.gmra.mrb[0].mxu0 %v670
        %v672 = vpop.f32.mrb[0].mxu0
        %v673 = vadd.f32 %v512, %v672
        %v674 = vpop.f32.mrb[0].mxu0
        %675 = vmatprep.mubr.f32.mxu0 0.0
        %v676 = vand.u32 %v420, 4294901760
        %677 = vmatmul.mubr.f32.gmra.mrb[0].mxu0 %v676
        %v678 = vpop.f32.mrb[0].mxu0
        %v679 = vadd.f32 %v522, %v678
        %v680 = vpop.f32.mrb[0].mxu0
        %681 = vmatprep.mubr.f32.mxu0 0.0
        %v682 = vand.u32 %v423, 4294901760
        %683 = vmatmul.mubr.f32.gmra.mrb[0].mxu0 %v682
        %v684 = vpop.f32.mrb[0].mxu0
        %v685 = vadd.f32 %v532, %v684
        %v686 = vpop.f32.mrb[0].mxu0
        %687 = vmatprep.mubr.f32.mxu0 0.0
        %v688 = vand.u32 %v426, 4294901760
        %689 = vmatmul.mubr.f32.gmra.mrb[0].mxu0 %v688
        %v690 = vpop.f32.mrb[0].mxu0
        %v691 = vadd.f32 %v542, %v690
        %v692 = vpop.f32.mrb[0].mxu0
        %693 = vdwg.mxu0
        %694 = vmatprep.subr.mxu0 0.0
        %v695 = vand.u32 %v355, 4294901760
        %v696 = vsub.f32 %v355, %v695
        %697 = vmatpush1.msra.mxu0 %v696
        %698 = vmatprep.subr.mxu0 0.0
        %v699 = vand.u32 %v356, 4294901760
        %v700 = vsub.f32 %v356, %v699
        %701 = vmatpush1.msra.mxu0 %v700
        %702 = vmatprep.subr.mxu0 0.0
        %v703 = vand.u32 %v357, 4294901760
        %v704 = vsub.f32 %v357, %v703
        %705 = vmatpush1.msra.mxu0 %v704
        %706 = vmatprep.subr.mxu0 0.0
        %v707 = vand.u32 %v358, 4294901760
        %v708 = vsub.f32 %v358, %v707
        %709 = vmatpush1.msra.mxu0 %v708
        %710 = vmatprep.subr.mxu0 0.0
        %v711 = vand.u32 %v364, 4294901760
        %v712 = vsub.f32 %v364, %v711
        %713 = vmatpush1.msra.mxu0 %v712
        %714 = vmatprep.subr.mxu0 0.0
        %v715 = vand.u32 %v366, 4294901760
        %v716 = vsub.f32 %v366, %v715
        %717 = vmatpush1.msra.mxu0 %v716
        %718 = vmatprep.subr.mxu0 0.0
        %v719 = vand.u32 %v368, 4294901760
        %v720 = vsub.f32 %v368, %v719
        %721 = vmatpush1.msra.mxu0 %v720
        %722 = vmatprep.subr.mxu0 0.0
        %v723 = vand.u32 %v370, 4294901760
        %v724 = vsub.f32 %v370, %v723
        %725 = vmatpush1.msra.mxu0 %v724
        %726 = vmatprep.subr.mxu0 0.0
        %v727 = vand.u32 %v376, 4294901760
        %v728 = vsub.f32 %v376, %v727
        %729 = vmatpush1.msra.mxu0 %v728
        %730 = vmatprep.subr.mxu0 0.0
        %v731 = vand.u32 %v378, 4294901760
        %v732 = vsub.f32 %v378, %v731
        %733 = vmatpush1.msra.mxu0 %v732
        %734 = vmatprep.subr.mxu0 0.0
        %v735 = vand.u32 %v380, 4294901760
        %v736 = vsub.f32 %v380, %v735
        %737 = vmatpush1.msra.mxu0 %v736
        %738 = vmatprep.subr.mxu0 0.0
        %v739 = vand.u32 %v382, 4294901760
        %v740 = vsub.f32 %v382, %v739
        %741 = vmatpush1.msra.mxu0 %v740
        %742 = vmatprep.subr.mxu0 0.0
        %743 = vmatpush1.msra.mxu0 0.0
        %744 = vmatprep.subr.mxu0 0.0
        %745 = vmatpush1.msra.mxu0 0.0
        %746 = vmatprep.subr.mxu0 0.0
        %747 = vmatpush1.msra.mxu0 0.0
        %748 = vmatprep.subr.mxu0 0.0
        %749 = vmatpush1.msra.mxu0 0.0
        %750 = vmatprep.subr.mxu0 0.0
        %751 = vmatpush1.msra.mxu0 0.0
        %752 = vmatprep.subr.mxu0 0.0
        %753 = vmatpush1.msra.mxu0 0.0
        %754 = vmatprep.subr.mxu0 0.0
        %755 = vmatpush1.msra.mxu0 0.0
        %756 = vmatprep.subr.mxu0 0.0
        %757 = vmatpush1.msra.mxu0 0.0
        %758 = vmatprep.subr.mxu0 0.0
        %759 = vmatpush1.msra.mxu0 0.0
        %760 = vmatprep.subr.mxu0 0.0
        %761 = vmatpush1.msra.mxu0 0.0
        %762 = vmatprep.subr.mxu0 0.0
        %763 = vmatpush1.msra.mxu0 0.0
        %764 = vmatprep.subr.mxu0 0.0
        %765 = vmatpush1.msra.mxu0 0.0
        %766 = vmatprep.subr.mxu0 0.0
        %767 = vmatpush1.msra.mxu0 0.0
        %768 = vmatprep.subr.mxu0 0.0
        %769 = vmatpush1.msra.mxu0 0.0
        %770 = vmatprep.subr.mxu0 0.0
        %771 = vmatpush1.msra.mxu0 0.0
        %772 = vmatprep.subr.mxu0 0.0
        %773 = vmatpush1.msra.mxu0 0.0
        %774 = vmatprep.subr.mxu0 0.0
        %775 = vmatpush1.msra.mxu0 0.0
        %776 = vmatprep.subr.mxu0 0.0
        %777 = vmatpush1.msra.mxu0 0.0
        %778 = vmatprep.subr.mxu0 0.0
        %779 = vmatpush1.msra.mxu0 0.0
        %780 = vmatprep.subr.mxu0 0.0
        %781 = vmatpush1.msra.mxu0 0.0
        %782 = vmatprep.mubr.f32.mxu0 0.0
        %v783 = vand.u32 %v417, 4294901760
        %v784 = vsub.f32 %v417, %v783
        %785 = vmatmul.mubr.f32.gmra.mrb[0].mxu0 %v784
        %v786 = vpop.f32.mrb[0].mxu0
        %v787 = vadd.f32 %v673, %v786
        %v788 = vpop.f32.mrb[0].mxu0
        %789 = vmatprep.mubr.f32.mxu0 0.0
        %v790 = vand.u32 %v420, 4294901760
        %v791 = vsub.f32 %v420, %v790
        %792 = vmatmul.mubr.f32.gmra.mrb[0].mxu0 %v791
        %v793 = vpop.f32.mrb[0].mxu0
        %v794 = vadd.f32 %v679, %v793
        %v795 = vpop.f32.mrb[0].mxu0
        %796 = vmatprep.mubr.f32.mxu0 0.0
        %v797 = vand.u32 %v423, 4294901760
        %v798 = vsub.f32 %v423, %v797
        %799 = vmatmul.mubr.f32.gmra.mrb[0].mxu0 %v798
        %v800 = vpop.f32.mrb[0].mxu0
        %v801 = vadd.f32 %v685, %v800
        %v802 = vpop.f32.mrb[0].mxu0
        %803 = vmatprep.mubr.f32.mxu0 0.0
        %v804 = vand.u32 %v426, 4294901760
        %v805 = vsub.f32 %v426, %v804
        %806 = vmatmul.mubr.f32.gmra.mrb[0].mxu0 %v805
        %v807 = vpop.f32.mrb[0].mxu0
        %v808 = vadd.f32 %v691, %v807
        %v809 = vpop.f32.mrb[0].mxu0
        %810 = vdwg.mxu0
        %811 = vmatprep.subr.mxu0 0.0
        %v812 = vand.u32 %v355, 4294901760
        %813 = vmatpush1.msra.mxu0 %v812
        %814 = vmatprep.subr.mxu0 0.0
        %v815 = vand.u32 %v356, 4294901760
        %816 = vmatpush1.msra.mxu0 %v815
        %817 = vmatprep.subr.mxu0 0.0
        %v818 = vand.u32 %v357, 4294901760
        %819 = vmatpush1.msra.mxu0 %v818
        %820 = vmatprep.subr.mxu0 0.0
        %v821 = vand.u32 %v358, 4294901760
        %822 = vmatpush1.msra.mxu0 %v821
        %823 = vmatprep.subr.mxu0 0.0
        %v824 = vand.u32 %v364, 4294901760
        %825 = vmatpush1.msra.mxu0 %v824
        %826 = vmatprep.subr.mxu0 0.0
        %v827 = vand.u32 %v366, 4294901760
        %828 = vmatpush1.msra.mxu0 %v827
        %829 = vmatprep.subr.mxu0 0.0
        %v830 = vand.u32 %v368, 4294901760
        %831 = vmatpush1.msra.mxu0 %v830
        %832 = vmatprep.subr.mxu0 0.0
        %v833 = vand.u32 %v370, 4294901760
        %834 = vmatpush1.msra.mxu0 %v833
        %835 = vmatprep.subr.mxu0 0.0
        %v836 = vand.u32 %v376, 4294901760
        %837 = vmatpush1.msra.mxu0 %v836
        %838 = vmatprep.subr.mxu0 0.0
        %v839 = vand.u32 %v378, 4294901760
        %840 = vmatpush1.msra.mxu0 %v839
        %841 = vmatprep.subr.mxu0 0.0
        %v842 = vand.u32 %v380, 4294901760
        %843 = vmatpush1.msra.mxu0 %v842
        %844 = vmatprep.subr.mxu0 0.0
        %v845 = vand.u32 %v382, 4294901760
        %846 = vmatpush1.msra.mxu0 %v845
        %847 = vmatprep.subr.mxu0 0.0
        %848 = vmatpush1.msra.mxu0 0.0
        %849 = vmatprep.subr.mxu0 0.0
        %850 = vmatpush1.msra.mxu0 0.0
        %851 = vmatprep.subr.mxu0 0.0
        %852 = vmatpush1.msra.mxu0 0.0
        %853 = vmatprep.subr.mxu0 0.0
        %854 = vmatpush1.msra.mxu0 0.0
        %855 = vmatprep.subr.mxu0 0.0
        %856 = vmatpush1.msra.mxu0 0.0
        %857 = vmatprep.subr.mxu0 0.0
        %858 = vmatpush1.msra.mxu0 0.0
        %859 = vmatprep.subr.mxu0 0.0
        %860 = vmatpush1.msra.mxu0 0.0
        %861 = vmatprep.subr.mxu0 0.0
        %862 = vmatpush1.msra.mxu0 0.0
        %863 = vmatprep.subr.mxu0 0.0
        %864 = vmatpush1.msra.mxu0 0.0
        %865 = vmatprep.subr.mxu0 0.0
        %866 = vmatpush1.msra.mxu0 0.0
        %867 = vmatprep.subr.mxu0 0.0
        %868 = vmatpush1.msra.mxu0 0.0
        %869 = vmatprep.subr.mxu0 0.0
        %870 = vmatpush1.msra.mxu0 0.0
        %871 = vmatprep.subr.mxu0 0.0
        %872 = vmatpush1.msra.mxu0 0.0
        %873 = vmatprep.subr.mxu0 0.0
        %874 = vmatpush1.msra.mxu0 0.0
        %875 = vmatprep.subr.mxu0 0.0
        %876 = vmatpush1.msra.mxu0 0.0
        %877 = vmatprep.subr.mxu0 0.0
        %878 = vmatpush1.msra.mxu0 0.0
        %879 = vmatprep.subr.mxu0 0.0
        %880 = vmatpush1.msra.mxu0 0.0
        %881 = vmatprep.subr.mxu0 0.0
        %882 = vmatpush1.msra.mxu0 0.0
        %883 = vmatprep.subr.mxu0 0.0
        %884 = vmatpush1.msra.mxu0 0.0
        %885 = vmatprep.subr.mxu0 0.0
        %886 = vmatpush1.msra.mxu0 0.0
        %887 = vmatprep.mubr.f32.mxu0 0.0
        %v888 = vand.u32 %v417, 4294901760
        %v889 = vsub.f32 %v417, %v888
        %v890 = vand.u32 %v889, 4294901760
        %891 = vmatmul.mubr.f32.gmra.mrb[0].mxu0 %v890
        %v892 = vpop.f32.mrb[0].mxu0
        %v893 = vadd.f32 %v787, %v892
        %v894 = vpop.f32.mrb[0].mxu0
        %895 = vmatprep.mubr.f32.mxu0 0.0
        %v896 = vand.u32 %v420, 4294901760
        %v897 = vsub.f32 %v420, %v896
        %v898 = vand.u32 %v897, 4294901760
        %899 = vmatmul.mubr.f32.gmra.mrb[0].mxu0 %v898
        %v900 = vpop.f32.mrb[0].mxu0
        %v901 = vadd.f32 %v794, %v900
        %v902 = vpop.f32.mrb[0].mxu0
        %903 = vmatprep.mubr.f32.mxu0 0.0
        %v904 = vand.u32 %v423, 4294901760
        %v905 = vsub.f32 %v423, %v904
        %v906 = vand.u32 %v905, 4294901760
        %907 = vmatmul.mubr.f32.gmra.mrb[0].mxu0 %v906
        %v908 = vpop.f32.mrb[0].mxu0
        %v909 = vadd.f32 %v801, %v908
        %v910 = vpop.f32.mrb[0].mxu0
        %911 = vmatprep.mubr.f32.mxu0 0.0
        %v912 = vand.u32 %v426, 4294901760
        %v913 = vsub.f32 %v426, %v912
        %v914 = vand.u32 %v913, 4294901760
        %915 = vmatmul.mubr.f32.gmra.mrb[0].mxu0 %v914
        %v916 = vpop.f32.mrb[0].mxu0
        %v917 = vadd.f32 %v808, %v916
        %v918 = vpop.f32.mrb[0].mxu0
        %919 = vdwg.mxu0
        %920 = vmatprep.subr.mxu0 0.0
        %v921 = vand.u32 %v355, 4294901760
        %v922 = vsub.f32 %v355, %v921
        %v923 = vand.u32 %v922, 4294901760
        %924 = vmatpush1.msra.mxu0 %v923
        %925 = vmatprep.subr.mxu0 0.0
        %v926 = vand.u32 %v356, 4294901760
        %v927 = vsub.f32 %v356, %v926
        %v928 = vand.u32 %v927, 4294901760
        %929 = vmatpush1.msra.mxu0 %v928
        %930 = vmatprep.subr.mxu0 0.0
        %v931 = vand.u32 %v357, 4294901760
        %v932 = vsub.f32 %v357, %v931
        %v933 = vand.u32 %v932, 4294901760
        %934 = vmatpush1.msra.mxu0 %v933
        %935 = vmatprep.subr.mxu0 0.0
        %v936 = vand.u32 %v358, 4294901760
        %v937 = vsub.f32 %v358, %v936
        %v938 = vand.u32 %v937, 4294901760
        %939 = vmatpush1.msra.mxu0 %v938
        %940 = vmatprep.subr.mxu0 0.0
        %v941 = vand.u32 %v364, 4294901760
        %v942 = vsub.f32 %v364, %v941
        %v943 = vand.u32 %v942, 4294901760
        %944 = vmatpush1.msra.mxu0 %v943
        %945 = vmatprep.subr.mxu0 0.0
        %v946 = vand.u32 %v366, 4294901760
        %v947 = vsub.f32 %v366, %v946
        %v948 = vand.u32 %v947, 4294901760
        %949 = vmatpush1.msra.mxu0 %v948
        %950 = vmatprep.subr.mxu0 0.0
        %v951 = vand.u32 %v368, 4294901760
        %v952 = vsub.f32 %v368, %v951
        %v953 = vand.u32 %v952, 4294901760
        %954 = vmatpush1.msra.mxu0 %v953
        %955 = vmatprep.subr.mxu0 0.0
        %v956 = vand.u32 %v370, 4294901760
        %v957 = vsub.f32 %v370, %v956
        %v958 = vand.u32 %v957, 4294901760
        %959 = vmatpush1.msra.mxu0 %v958
        %960 = vmatprep.subr.mxu0 0.0
        %v961 = vand.u32 %v376, 4294901760
        %v962 = vsub.f32 %v376, %v961
        %v963 = vand.u32 %v962, 4294901760
        %964 = vmatpush1.msra.mxu0 %v963
        %965 = vmatprep.subr.mxu0 0.0
        %v966 = vand.u32 %v378, 4294901760
        %v967 = vsub.f32 %v378, %v966
        %v968 = vand.u32 %v967, 4294901760
        %969 = vmatpush1.msra.mxu0 %v968
        %970 = vmatprep.subr.mxu0 0.0
        %v971 = vand.u32 %v380, 4294901760
        %v972 = vsub.f32 %v380, %v971
        %v973 = vand.u32 %v972, 4294901760
        %974 = vmatpush1.msra.mxu0 %v973
        %975 = vmatprep.subr.mxu0 0.0
        %v976 = vand.u32 %v382, 4294901760
        %v977 = vsub.f32 %v382, %v976
        %v978 = vand.u32 %v977, 4294901760
        %979 = vmatpush1.msra.mxu0 %v978
        %980 = vmatprep.subr.mxu0 0.0
        %981 = vmatpush1.msra.mxu0 0.0
        %982 = vmatprep.subr.mxu0 0.0
        %983 = vmatpush1.msra.mxu0 0.0
        %984 = vmatprep.subr.mxu0 0.0
        %985 = vmatpush1.msra.mxu0 0.0
        %986 = vmatprep.subr.mxu0 0.0
        %987 = vmatpush1.msra.mxu0 0.0
        %988 = vmatprep.subr.mxu0 0.0
        %989 = vmatpush1.msra.mxu0 0.0
        %990 = vmatprep.subr.mxu0 0.0
        %991 = vmatpush1.msra.mxu0 0.0
        %992 = vmatprep.subr.mxu0 0.0
        %993 = vmatpush1.msra.mxu0 0.0
        %994 = vmatprep.subr.mxu0 0.0
        %995 = vmatpush1.msra.mxu0 0.0
        %996 = vmatprep.subr.mxu0 0.0
        %997 = vmatpush1.msra.mxu0 0.0
        %998 = vmatprep.subr.mxu0 0.0
        %999 = vmatpush1.msra.mxu0 0.0
        %1000 = vmatprep.subr.mxu0 0.0
        %1001 = vmatpush1.msra.mxu0 0.0
        %1002 = vmatprep.subr.mxu0 0.0
        %1003 = vmatpush1.msra.mxu0 0.0
        %1004 = vmatprep.subr.mxu0 0.0
        %1005 = vmatpush1.msra.mxu0 0.0
        %1006 = vmatprep.subr.mxu0 0.0
        %1007 = vmatpush1.msra.mxu0 0.0
        %1008 = vmatprep.subr.mxu0 0.0
        %1009 = vmatpush1.msra.mxu0 0.0
        %1010 = vmatprep.subr.mxu0 0.0
        %1011 = vmatpush1.msra.mxu0 0.0
        %1012 = vmatprep.subr.mxu0 0.0
        %1013 = vmatpush1.msra.mxu0 0.0
        %1014 = vmatprep.subr.mxu0 0.0
        %1015 = vmatpush1.msra.mxu0 0.0
        %1016 = vmatprep.subr.mxu0 0.0
        %1017 = vmatpush1.msra.mxu0 0.0
        %1018 = vmatprep.subr.mxu0 0.0
        %1019 = vmatpush1.msra.mxu0 0.0
        %1020 = vmatprep.mubr.f32.mxu0 0.0
        %v1021 = vand.u32 %v417, 4294901760
        %1022 = vmatmul.mubr.f32.gmra.mrb[0].mxu0 %v1021
        %v1023 = vpop.f32.mrb[0].mxu0
        %v1024 = vadd.f32 %v893, %v1023
        %v1025 = vpop.f32.mrb[0].mxu0
        %1026 = vmatprep.mubr.f32.mxu0 0.0
        %v1027 = vand.u32 %v420, 4294901760
        %1028 = vmatmul.mubr.f32.gmra.mrb[0].mxu0 %v1027
        %v1029 = vpop.f32.mrb[0].mxu0
        %v1030 = vadd.f32 %v901, %v1029
        %v1031 = vpop.f32.mrb[0].mxu0
        %1032 = vmatprep.mubr.f32.mxu0 0.0
        %v1033 = vand.u32 %v423, 4294901760
        %1034 = vmatmul.mubr.f32.gmra.mrb[0].mxu0 %v1033
        %v1035 = vpop.f32.mrb[0].mxu0
        %v1036 = vadd.f32 %v909, %v1035
        %v1037 = vpop.f32.mrb[0].mxu0
        %1038 = vmatprep.mubr.f32.mxu0 0.0
        %v1039 = vand.u32 %v426, 4294901760
        %1040 = vmatmul.mubr.f32.gmra.mrb[0].mxu0 %v1039
        %v1041 = vpop.f32.mrb[0].mxu0
        %v1042 = vadd.f32 %v917, %v1041
        %v1043 = vpop.f32.mrb[0].mxu0
        %1044 = vdwg.mxu0
        %1045 = vmatprep.subr.mxu0 0.0
        %v1046 = vand.u32 %v355, 4294901760
        %1047 = vmatpush1.msra.mxu0 %v1046
        %1048 = vmatprep.subr.mxu0 0.0
        %v1049 = vand.u32 %v356, 4294901760
        %1050 = vmatpush1.msra.mxu0 %v1049
        %1051 = vmatprep.subr.mxu0 0.0
        %v1052 = vand.u32 %v357, 4294901760
        %1053 = vmatpush1.msra.mxu0 %v1052
        %1054 = vmatprep.subr.mxu0 0.0
        %v1055 = vand.u32 %v358, 4294901760
        %1056 = vmatpush1.msra.mxu0 %v1055
        %1057 = vmatprep.subr.mxu0 0.0
        %v1058 = vand.u32 %v364, 4294901760
        %1059 = vmatpush1.msra.mxu0 %v1058
        %1060 = vmatprep.subr.mxu0 0.0
        %v1061 = vand.u32 %v366, 4294901760
        %1062 = vmatpush1.msra.mxu0 %v1061
        %1063 = vmatprep.subr.mxu0 0.0
        %v1064 = vand.u32 %v368, 4294901760
        %1065 = vmatpush1.msra.mxu0 %v1064
        %1066 = vmatprep.subr.mxu0 0.0
        %v1067 = vand.u32 %v370, 4294901760
        %1068 = vmatpush1.msra.mxu0 %v1067
        %1069 = vmatprep.subr.mxu0 0.0
        %v1070 = vand.u32 %v376, 4294901760
        %1071 = vmatpush1.msra.mxu0 %v1070
        %1072 = vmatprep.subr.mxu0 0.0
        %v1073 = vand.u32 %v378, 4294901760
        %1074 = vmatpush1.msra.mxu0 %v1073
        %1075 = vmatprep.subr.mxu0 0.0
        %v1076 = vand.u32 %v380, 4294901760
        %1077 = vmatpush1.msra.mxu0 %v1076
        %1078 = vmatprep.subr.mxu0 0.0
        %v1079 = vand.u32 %v382, 4294901760
        %1080 = vmatpush1.msra.mxu0 %v1079
        %1081 = vmatprep.subr.mxu0 0.0
        %1082 = vmatpush1.msra.mxu0 0.0
        %1083 = vmatprep.subr.mxu0 0.0
        %1084 = vmatpush1.msra.mxu0 0.0
        %1085 = vmatprep.subr.mxu0 0.0
        %1086 = vmatpush1.msra.mxu0 0.0
        %1087 = vmatprep.subr.mxu0 0.0
        %1088 = vmatpush1.msra.mxu0 0.0
        %1089 = vmatprep.subr.mxu0 0.0
        %1090 = vmatpush1.msra.mxu0 0.0
        %1091 = vmatprep.subr.mxu0 0.0
        %1092 = vmatpush1.msra.mxu0 0.0
        %1093 = vmatprep.subr.mxu0 0.0
        %1094 = vmatpush1.msra.mxu0 0.0
        %1095 = vmatprep.subr.mxu0 0.0
        %1096 = vmatpush1.msra.mxu0 0.0
        %1097 = vmatprep.subr.mxu0 0.0
        %1098 = vmatpush1.msra.mxu0 0.0
        %1099 = vmatprep.subr.mxu0 0.0
        %1100 = vmatpush1.msra.mxu0 0.0
        %1101 = vmatprep.subr.mxu0 0.0
        %1102 = vmatpush1.msra.mxu0 0.0
        %1103 = vmatprep.subr.mxu0 0.0
        %1104 = vmatpush1.msra.mxu0 0.0
        %1105 = vmatprep.subr.mxu0 0.0
        %1106 = vmatpush1.msra.mxu0 0.0
        %1107 = vmatprep.subr.mxu0 0.0
        %1108 = vmatpush1.msra.mxu0 0.0
        %1109 = vmatprep.subr.mxu0 0.0
        %1110 = vmatpush1.msra.mxu0 0.0
        %1111 = vmatprep.subr.mxu0 0.0
        %1112 = vmatpush1.msra.mxu0 0.0
        %1113 = vmatprep.subr.mxu0 0.0
        %1114 = vmatpush1.msra.mxu0 0.0
        %1115 = vmatprep.subr.mxu0 0.0
        %1116 = vmatpush1.msra.mxu0 0.0
        %1117 = vmatprep.subr.mxu0 0.0
        %1118 = vmatpush1.msra.mxu0 0.0
        %1119 = vmatprep.subr.mxu0 0.0
        %1120 = vmatpush1.msra.mxu0 0.0
        %1121 = vmatprep.mubr.f32.mxu0 0.0
        %v1122 = vand.u32 %v417, 4294901760
        %1123 = vmatmul.mubr.f32.gmra.mrb[0].mxu0 %v1122
        %v1124 = vpop.f32.mrb[0].mxu0
        %v1125 = vadd.f32 %v1024, %v1124
        %v1126 = vpop.f32.mrb[0].mxu0
        %1127 = vmatprep.mubr.f32.mxu0 0.0
        %v1128 = vand.u32 %v420, 4294901760
        %1129 = vmatmul.mubr.f32.gmra.mrb[0].mxu0 %v1128
        %v1130 = vpop.f32.mrb[0].mxu0
        %v1131 = vadd.f32 %v1030, %v1130
        %v1132 = vpop.f32.mrb[0].mxu0
        %1133 = vmatprep.mubr.f32.mxu0 0.0
        %v1134 = vand.u32 %v423, 4294901760
        %1135 = vmatmul.mubr.f32.gmra.mrb[0].mxu0 %v1134
        %v1136 = vpop.f32.mrb[0].mxu0
        %v1137 = vadd.f32 %v1036, %v1136
        %v1138 = vpop.f32.mrb[0].mxu0
        %1139 = vmatprep.mubr.f32.mxu0 0.0
        %v1140 = vand.u32 %v426, 4294901760
        %1141 = vmatmul.mubr.f32.gmra.mrb[0].mxu0 %v1140
        %v1142 = vpop.f32.mrb[0].mxu0
        %v1143 = vadd.f32 %v1042, %v1142
        %v1144 = vpop.f32.mrb[0].mxu0
        %1145 = vdwg.mxu0
        %v1146 = vmax.f32 %v1125, 0.0
        %v1147 = vmax.f32 %v1131, 0.0
        %v1148 = vmax.f32 %v1137, 0.0
        %v1149 = vmax.f32 %v1143, 0.0
        %v1150 = vld [vmem:[%s4] sm:$0xff]
        %v1151 = vld [vmem:[%s5] sm:$0xff]
        %1153 = vset.pattern.permute.xlu0 0
        %1154 = vperm.xlu0 %1153, %v1151
        %v1155 = vpop.permute.xlu0 %1154
        %vm1157 = vcmask 261120
        %v1159 = vsel %vm1157, %v1150, 0
        %1161 = vmatprep.subr.mxu0 0.0
        %v1162 = vand.u32 %v1146, 4294901760
        %1163 = vmatpush1.msra.mxu0 %v1162
        %1164 = vmatprep.subr.mxu0 0.0
        %v1165 = vand.u32 %v1147, 4294901760
        %1166 = vmatpush1.msra.mxu0 %v1165
        %1167 = vmatprep.subr.mxu0 0.0
        %v1168 = vand.u32 %v1148, 4294901760
        %1169 = vmatpush1.msra.mxu0 %v1168
        %1170 = vmatprep.subr.mxu0 0.0
        %v1171 = vand.u32 %v1149, 4294901760
        %1172 = vmatpush1.msra.mxu0 %v1171
        %1173 = vmatprep.subr.mxu0 0.0
        %1174 = vmatpush1.msra.mxu0 0.0
        %1175 = vmatprep.subr.mxu0 0.0
        %1176 = vmatpush1.msra.mxu0 0.0
        %1177 = vmatprep.subr.mxu0 0.0
        %1178 = vmatpush1.msra.mxu0 0.0
        %1179 = vmatprep.subr.mxu0 0.0
        %1180 = vmatpush1.msra.mxu0 0.0
        %1181 = vmatprep.subr.mxu0 0.0
        %1182 = vmatpush1.msra.mxu0 0.0
        %1183 = vmatprep.subr.mxu0 0.0
        %1184 = vmatpush1.msra.mxu0 0.0
        %1185 = vmatprep.subr.mxu0 0.0
        %1186 = vmatpush1.msra.mxu0 0.0
        %1187 = vmatprep.subr.mxu0 0.0
        %1188 = vmatpush1.msra.mxu0 0.0
        %1189 = vmatprep.subr.mxu0 0.0
        %1190 = vmatpush1.msra.mxu0 0.0
        %1191 = vmatprep.subr.mxu0 0.0
        %1192 = vmatpush1.msra.mxu0 0.0
        %1193 = vmatprep.subr.mxu0 0.0
        %1194 = vmatpush1.msra.mxu0 0.0
        %1195 = vmatprep.subr.mxu0 0.0
        %1196 = vmatpush1.msra.mxu0 0.0
        %1197 = vmatprep.subr.mxu0 0.0
        %1198 = vmatpush1.msra.mxu0 0.0
        %1199 = vmatprep.subr.mxu0 0.0
        %1200 = vmatpush1.msra.mxu0 0.0
        %1201 = vmatprep.subr.mxu0 0.0
        %1202 = vmatpush1.msra.mxu0 0.0
        %1203 = vmatprep.subr.mxu0 0.0
        %1204 = vmatpush1.msra.mxu0 0.0
        %1205 = vmatprep.subr.mxu0 0.0
        %1206 = vmatpush1.msra.mxu0 0.0
        %1207 = vmatprep.subr.mxu0 0.0
        %1208 = vmatpush1.msra.mxu0 0.0
        %1209 = vmatprep.subr.mxu0 0.0
        %1210 = vmatpush1.msra.mxu0 0.0
        %1211 = vmatprep.subr.mxu0 0.0
        %1212 = vmatpush1.msra.mxu0 0.0
        %1213 = vmatprep.subr.mxu0 0.0
        %1214 = vmatpush1.msra.mxu0 0.0
        %1215 = vmatprep.subr.mxu0 0.0
        %1216 = vmatpush1.msra.mxu0 0.0
        %1217 = vmatprep.subr.mxu0 0.0
        %1218 = vmatpush1.msra.mxu0 0.0
        %1219 = vmatprep.subr.mxu0 0.0
        %1220 = vmatpush1.msra.mxu0 0.0
        %1221 = vmatprep.subr.mxu0 0.0
        %1222 = vmatpush1.msra.mxu0 0.0
        %1223 = vmatprep.subr.mxu0 0.0
        %1224 = vmatpush1.msra.mxu0 0.0
        %1225 = vmatprep.subr.mxu0 0.0
        %1226 = vmatpush1.msra.mxu0 0.0
        %1227 = vmatprep.subr.mxu0 0.0
        %1228 = vmatpush1.msra.mxu0 0.0
        %1229 = vmatprep.mubr.f32.mxu0 0.0
        %v1230 = vand.u32 %v1159, 4294901760
        %v1231 = vsub.f32 %v1159, %v1230
        %v1232 = vand.u32 %v1231, 4294901760
        %v1233 = vsub.f32 %v1231, %v1232
        %v1234 = vand.u32 %v1233, 4294901760
        %1235 = vmatmul.mubr.f32.gmra.mrb[0].mxu0 %v1234
        %v1236 = vpop.f32.mrb[0].mxu0
        %v1237 = vadd.f32 %v1155, %v1236
        %v1238 = vpop.f32.mrb[0].mxu0
        %1239 = vdwg.mxu0
        %1240 = vmatprep.subr.mxu0 0.0
        %v1241 = vand.u32 %v1146, 4294901760
        %v1242 = vsub.f32 %v1146, %v1241
        %v1243 = vand.u32 %v1242, 4294901760
        %v1244 = vsub.f32 %v1242, %v1243
        %v1245 = vand.u32 %v1244, 4294901760
        %1246 = vmatpush1.msra.mxu0 %v1245
        %1247 = vmatprep.subr.mxu0 0.0
        %v1248 = vand.u32 %v1147, 4294901760
        %v1249 = vsub.f32 %v1147, %v1248
        %v1250 = vand.u32 %v1249, 4294901760
        %v1251 = vsub.f32 %v1249, %v1250
        %v1252 = vand.u32 %v1251, 4294901760
        %1253 = vmatpush1.msra.mxu0 %v1252
        %1254 = vmatprep.subr.mxu0 0.0
        %v1255 = vand.u32 %v1148, 4294901760
        %v1256 = vsub.f32 %v1148, %v1255
        %v1257 = vand.u32 %v1256, 4294901760
        %v1258 = vsub.f32 %v1256, %v1257
        %v1259 = vand.u32 %v1258, 4294901760
        %1260 = vmatpush1.msra.mxu0 %v1259
        %1261 = vmatprep.subr.mxu0 0.0
        %v1262 = vand.u32 %v1149, 4294901760
        %v1263 = vsub.f32 %v1149, %v1262
        %v1264 = vand.u32 %v1263, 4294901760
        %v1265 = vsub.f32 %v1263, %v1264
        %v1266 = vand.u32 %v1265, 4294901760
        %1267 = vmatpush1.msra.mxu0 %v1266
        %1268 = vmatprep.subr.mxu0 0.0
        %1269 = vmatpush1.msra.mxu0 0.0
        %1270 = vmatprep.subr.mxu0 0.0
        %1271 = vmatpush1.msra.mxu0 0.0
        %1272 = vmatprep.subr.mxu0 0.0
        %1273 = vmatpush1.msra.mxu0 0.0
        %1274 = vmatprep.subr.mxu0 0.0
        %1275 = vmatpush1.msra.mxu0 0.0
        %1276 = vmatprep.subr.mxu0 0.0
        %1277 = vmatpush1.msra.mxu0 0.0
        %1278 = vmatprep.subr.mxu0 0.0
        %1279 = vmatpush1.msra.mxu0 0.0
        %1280 = vmatprep.subr.mxu0 0.0
        %1281 = vmatpush1.msra.mxu0 0.0
        %1282 = vmatprep.subr.mxu0 0.0
        %1283 = vmatpush1.msra.mxu0 0.0
        %1284 = vmatprep.subr.mxu0 0.0
        %1285 = vmatpush1.msra.mxu0 0.0
        %1286 = vmatprep.subr.mxu0 0.0
        %1287 = vmatpush1.msra.mxu0 0.0
        %1288 = vmatprep.subr.mxu0 0.0
        %1289 = vmatpush1.msra.mxu0 0.0
        %1290 = vmatprep.subr.mxu0 0.0
        %1291 = vmatpush1.msra.mxu0 0.0
        %1292 = vmatprep.subr.mxu0 0.0
        %1293 = vmatpush1.msra.mxu0 0.0
        %1294 = vmatprep.subr.mxu0 0.0
        %1295 = vmatpush1.msra.mxu0 0.0
        %1296 = vmatprep.subr.mxu0 0.0
        %1297 = vmatpush1.msra.mxu0 0.0
        %1298 = vmatprep.subr.mxu0 0.0
        %1299 = vmatpush1.msra.mxu0 0.0
        %1300 = vmatprep.subr.mxu0 0.0
        %1301 = vmatpush1.msra.mxu0 0.0
        %1302 = vmatprep.subr.mxu0 0.0
        %1303 = vmatpush1.msra.mxu0 0.0
        %1304 = vmatprep.subr.mxu0 0.0
        %1305 = vmatpush1.msra.mxu0 0.0
        %1306 = vmatprep.subr.mxu0 0.0
        %1307 = vmatpush1.msra.mxu0 0.0
        %1308 = vmatprep.subr.mxu0 0.0
        %1309 = vmatpush1.msra.mxu0 0.0
        %1310 = vmatprep.subr.mxu0 0.0
        %1311 = vmatpush1.msra.mxu0 0.0
        %1312 = vmatprep.subr.mxu0 0.0
        %1313 = vmatpush1.msra.mxu0 0.0
        %1314 = vmatprep.subr.mxu0 0.0
        %1315 = vmatpush1.msra.mxu0 0.0
        %1316 = vmatprep.subr.mxu0 0.0
        %1317 = vmatpush1.msra.mxu0 0.0
        %1318 = vmatprep.subr.mxu0 0.0
        %1319 = vmatpush1.msra.mxu0 0.0
        %1320 = vmatprep.subr.mxu0 0.0
        %1321 = vmatpush1.msra.mxu0 0.0
        %1322 = vmatprep.subr.mxu0 0.0
        %1323 = vmatpush1.msra.mxu0 0.0
        %1324 = vmatprep.mubr.f32.mxu0 0.0
        %v1325 = vand.u32 %v1159, 4294901760
        %1326 = vmatmul.mubr.f32.gmra.mrb[0].mxu0 %v1325
        %v1327 = vpop.f32.mrb[0].mxu0
        %v1328 = vadd.f32 %v1237, %v1327
        %v1329 = vpop.f32.mrb[0].mxu0
        %1330 = vdwg.mxu0
        %1331 = vmatprep.subr.mxu0 0.0
        %v1332 = vand.u32 %v1146, 4294901760
        %v1333 = vsub.f32 %v1146, %v1332
        %1334 = vmatpush1.msra.mxu0 %v1333
        %1335 = vmatprep.subr.mxu0 0.0
        %v1336 = vand.u32 %v1147, 4294901760
        %v1337 = vsub.f32 %v1147, %v1336
        %1338 = vmatpush1.msra.mxu0 %v1337
        %1339 = vmatprep.subr.mxu0 0.0
        %v1340 = vand.u32 %v1148, 4294901760
        %v1341 = vsub.f32 %v1148, %v1340
        %1342 = vmatpush1.msra.mxu0 %v1341
        %1343 = vmatprep.subr.mxu0 0.0
        %v1344 = vand.u32 %v1149, 4294901760
        %v1345 = vsub.f32 %v1149, %v1344
        %1346 = vmatpush1.msra.mxu0 %v1345
        %1347 = vmatprep.subr.mxu0 0.0
        %1348 = vmatpush1.msra.mxu0 0.0
        %1349 = vmatprep.subr.mxu0 0.0
        %1350 = vmatpush1.msra.mxu0 0.0
        %1351 = vmatprep.subr.mxu0 0.0
        %1352 = vmatpush1.msra.mxu0 0.0
        %1353 = vmatprep.subr.mxu0 0.0
        %1354 = vmatpush1.msra.mxu0 0.0
        %1355 = vmatprep.subr.mxu0 0.0
        %1356 = vmatpush1.msra.mxu0 0.0
        %1357 = vmatprep.subr.mxu0 0.0
        %1358 = vmatpush1.msra.mxu0 0.0
        %1359 = vmatprep.subr.mxu0 0.0
        %1360 = vmatpush1.msra.mxu0 0.0
        %1361 = vmatprep.subr.mxu0 0.0
        %1362 = vmatpush1.msra.mxu0 0.0
        %1363 = vmatprep.subr.mxu0 0.0
        %1364 = vmatpush1.msra.mxu0 0.0
        %1365 = vmatprep.subr.mxu0 0.0
        %1366 = vmatpush1.msra.mxu0 0.0
        %1367 = vmatprep.subr.mxu0 0.0
        %1368 = vmatpush1.msra.mxu0 0.0
        %1369 = vmatprep.subr.mxu0 0.0
        %1370 = vmatpush1.msra.mxu0 0.0
        %1371 = vmatprep.subr.mxu0 0.0
        %1372 = vmatpush1.msra.mxu0 0.0
        %1373 = vmatprep.subr.mxu0 0.0
        %1374 = vmatpush1.msra.mxu0 0.0
        %1375 = vmatprep.subr.mxu0 0.0
        %1376 = vmatpush1.msra.mxu0 0.0
        %1377 = vmatprep.subr.mxu0 0.0
        %1378 = vmatpush1.msra.mxu0 0.0
        %1379 = vmatprep.subr.mxu0 0.0
        %1380 = vmatpush1.msra.mxu0 0.0
        %1381 = vmatprep.subr.mxu0 0.0
        %1382 = vmatpush1.msra.mxu0 0.0
        %1383 = vmatprep.subr.mxu0 0.0
        %1384 = vmatpush1.msra.mxu0 0.0
        %1385 = vmatprep.subr.mxu0 0.0
        %1386 = vmatpush1.msra.mxu0 0.0
        %1387 = vmatprep.subr.mxu0 0.0
        %1388 = vmatpush1.msra.mxu0 0.0
        %1389 = vmatprep.subr.mxu0 0.0
        %1390 = vmatpush1.msra.mxu0 0.0
        %1391 = vmatprep.subr.mxu0 0.0
        %1392 = vmatpush1.msra.mxu0 0.0
        %1393 = vmatprep.subr.mxu0 0.0
        %1394 = vmatpush1.msra.mxu0 0.0
        %1395 = vmatprep.subr.mxu0 0.0
        %1396 = vmatpush1.msra.mxu0 0.0
        %1397 = vmatprep.subr.mxu0 0.0
        %1398 = vmatpush1.msra.mxu0 0.0
        %1399 = vmatprep.subr.mxu0 0.0
        %1400 = vmatpush1.msra.mxu0 0.0
        %1401 = vmatprep.subr.mxu0 0.0
        %1402 = vmatpush1.msra.mxu0 0.0
        %1403 = vmatprep.mubr.f32.mxu0 0.0
        %v1404 = vand.u32 %v1159, 4294901760
        %v1405 = vsub.f32 %v1159, %v1404
        %1406 = vmatmul.mubr.f32.gmra.mrb[0].mxu0 %v1405
        %v1407 = vpop.f32.mrb[0].mxu0
        %v1408 = vadd.f32 %v1328, %v1407
        %v1409 = vpop.f32.mrb[0].mxu0
        %1410 = vdwg.mxu0
        %1411 = vmatprep.subr.mxu0 0.0
        %v1412 = vand.u32 %v1146, 4294901760
        %1413 = vmatpush1.msra.mxu0 %v1412
        %1414 = vmatprep.subr.mxu0 0.0
        %v1415 = vand.u32 %v1147, 4294901760
        %1416 = vmatpush1.msra.mxu0 %v1415
        %1417 = vmatprep.subr.mxu0 0.0
        %v1418 = vand.u32 %v1148, 4294901760
        %1419 = vmatpush1.msra.mxu0 %v1418
        %1420 = vmatprep.subr.mxu0 0.0
        %v1421 = vand.u32 %v1149, 4294901760
        %1422 = vmatpush1.msra.mxu0 %v1421
        %1423 = vmatprep.subr.mxu0 0.0
        %1424 = vmatpush1.msra.mxu0 0.0
        %1425 = vmatprep.subr.mxu0 0.0
        %1426 = vmatpush1.msra.mxu0 0.0
        %1427 = vmatprep.subr.mxu0 0.0
        %1428 = vmatpush1.msra.mxu0 0.0
        %1429 = vmatprep.subr.mxu0 0.0
        %1430 = vmatpush1.msra.mxu0 0.0
        %1431 = vmatprep.subr.mxu0 0.0
        %1432 = vmatpush1.msra.mxu0 0.0
        %1433 = vmatprep.subr.mxu0 0.0
        %1434 = vmatpush1.msra.mxu0 0.0
        %1435 = vmatprep.subr.mxu0 0.0
        %1436 = vmatpush1.msra.mxu0 0.0
        %1437 = vmatprep.subr.mxu0 0.0
        %1438 = vmatpush1.msra.mxu0 0.0
        %1439 = vmatprep.subr.mxu0 0.0
        %1440 = vmatpush1.msra.mxu0 0.0
        %1441 = vmatprep.subr.mxu0 0.0
        %1442 = vmatpush1.msra.mxu0 0.0
        %1443 = vmatprep.subr.mxu0 0.0
        %1444 = vmatpush1.msra.mxu0 0.0
        %1445 = vmatprep.subr.mxu0 0.0
        %1446 = vmatpush1.msra.mxu0 0.0
        %1447 = vmatprep.subr.mxu0 0.0
        %1448 = vmatpush1.msra.mxu0 0.0
        %1449 = vmatprep.subr.mxu0 0.0
        %1450 = vmatpush1.msra.mxu0 0.0
        %1451 = vmatprep.subr.mxu0 0.0
        %1452 = vmatpush1.msra.mxu0 0.0
        %1453 = vmatprep.subr.mxu0 0.0
        %1454 = vmatpush1.msra.mxu0 0.0
        %1455 = vmatprep.subr.mxu0 0.0
        %1456 = vmatpush1.msra.mxu0 0.0
        %1457 = vmatprep.subr.mxu0 0.0
        %1458 = vmatpush1.msra.mxu0 0.0
        %1459 = vmatprep.subr.mxu0 0.0
        %1460 = vmatpush1.msra.mxu0 0.0
        %1461 = vmatprep.subr.mxu0 0.0
        %1462 = vmatpush1.msra.mxu0 0.0
        %1463 = vmatprep.subr.mxu0 0.0
        %1464 = vmatpush1.msra.mxu0 0.0
        %1465 = vmatprep.subr.mxu0 0.0
        %1466 = vmatpush1.msra.mxu0 0.0
        %1467 = vmatprep.subr.mxu0 0.0
        %1468 = vmatpush1.msra.mxu0 0.0
        %1469 = vmatprep.subr.mxu0 0.0
        %1470 = vmatpush1.msra.mxu0 0.0
        %1471 = vmatprep.subr.mxu0 0.0
        %1472 = vmatpush1.msra.mxu0 0.0
        %1473 = vmatprep.subr.mxu0 0.0
        %1474 = vmatpush1.msra.mxu0 0.0
        %1475 = vmatprep.subr.mxu0 0.0
        %1476 = vmatpush1.msra.mxu0 0.0
        %1477 = vmatprep.subr.mxu0 0.0
        %1478 = vmatpush1.msra.mxu0 0.0
        %1479 = vmatprep.mubr.f32.mxu0 0.0
        %v1480 = vand.u32 %v1159, 4294901760
        %v1481 = vsub.f32 %v1159, %v1480
        %v1482 = vand.u32 %v1481, 4294901760
        %1483 = vmatmul.mubr.f32.gmra.mrb[0].mxu0 %v1482
        %v1484 = vpop.f32.mrb[0].mxu0
        %v1485 = vadd.f32 %v1408, %v1484
        %v1486 = vpop.f32.mrb[0].mxu0
        %1487 = vdwg.mxu0
        %1488 = vmatprep.subr.mxu0 0.0
        %v1489 = vand.u32 %v1146, 4294901760
        %v1490 = vsub.f32 %v1146, %v1489
        %v1491 = vand.u32 %v1490, 4294901760
        %1492 = vmatpush1.msra.mxu0 %v1491
        %1493 = vmatprep.subr.mxu0 0.0
        %v1494 = vand.u32 %v1147, 4294901760
        %v1495 = vsub.f32 %v1147, %v1494
        %v1496 = vand.u32 %v1495, 4294901760
        %1497 = vmatpush1.msra.mxu0 %v1496
        %1498 = vmatprep.subr.mxu0 0.0
        %v1499 = vand.u32 %v1148, 4294901760
        %v1500 = vsub.f32 %v1148, %v1499
        %v1501 = vand.u32 %v1500, 4294901760
        %1502 = vmatpush1.msra.mxu0 %v1501
        %1503 = vmatprep.subr.mxu0 0.0
        %v1504 = vand.u32 %v1149, 4294901760
        %v1505 = vsub.f32 %v1149, %v1504
        %v1506 = vand.u32 %v1505, 4294901760
        %1507 = vmatpush1.msra.mxu0 %v1506
        %1508 = vmatprep.subr.mxu0 0.0
        %1509 = vmatpush1.msra.mxu0 0.0
        %1510 = vmatprep.subr.mxu0 0.0
        %1511 = vmatpush1.msra.mxu0 0.0
        %1512 = vmatprep.subr.mxu0 0.0
        %1513 = vmatpush1.msra.mxu0 0.0
        %1514 = vmatprep.subr.mxu0 0.0
        %1515 = vmatpush1.msra.mxu0 0.0
        %1516 = vmatprep.subr.mxu0 0.0
        %1517 = vmatpush1.msra.mxu0 0.0
        %1518 = vmatprep.subr.mxu0 0.0
        %1519 = vmatpush1.msra.mxu0 0.0
        %1520 = vmatprep.subr.mxu0 0.0
        %1521 = vmatpush1.msra.mxu0 0.0
        %1522 = vmatprep.subr.mxu0 0.0
        %1523 = vmatpush1.msra.mxu0 0.0
        %1524 = vmatprep.subr.mxu0 0.0
        %1525 = vmatpush1.msra.mxu0 0.0
        %1526 = vmatprep.subr.mxu0 0.0
        %1527 = vmatpush1.msra.mxu0 0.0
        %1528 = vmatprep.subr.mxu0 0.0
        %1529 = vmatpush1.msra.mxu0 0.0
        %1530 = vmatprep.subr.mxu0 0.0
        %1531 = vmatpush1.msra.mxu0 0.0
        %1532 = vmatprep.subr.mxu0 0.0
        %1533 = vmatpush1.msra.mxu0 0.0
        %1534 = vmatprep.subr.mxu0 0.0
        %1535 = vmatpush1.msra.mxu0 0.0
        %1536 = vmatprep.subr.mxu0 0.0
        %1537 = vmatpush1.msra.mxu0 0.0
        %1538 = vmatprep.subr.mxu0 0.0
        %1539 = vmatpush1.msra.mxu0 0.0
        %1540 = vmatprep.subr.mxu0 0.0
        %1541 = vmatpush1.msra.mxu0 0.0
        %1542 = vmatprep.subr.mxu0 0.0
        %1543 = vmatpush1.msra.mxu0 0.0
        %1544 = vmatprep.subr.mxu0 0.0
        %1545 = vmatpush1.msra.mxu0 0.0
        %1546 = vmatprep.subr.mxu0 0.0
        %1547 = vmatpush1.msra.mxu0 0.0
        %1548 = vmatprep.subr.mxu0 0.0
        %1549 = vmatpush1.msra.mxu0 0.0
        %1550 = vmatprep.subr.mxu0 0.0
        %1551 = vmatpush1.msra.mxu0 0.0
        %1552 = vmatprep.subr.mxu0 0.0
        %1553 = vmatpush1.msra.mxu0 0.0
        %1554 = vmatprep.subr.mxu0 0.0
        %1555 = vmatpush1.msra.mxu0 0.0
        %1556 = vmatprep.subr.mxu0 0.0
        %1557 = vmatpush1.msra.mxu0 0.0
        %1558 = vmatprep.subr.mxu0 0.0
        %1559 = vmatpush1.msra.mxu0 0.0
        %1560 = vmatprep.subr.mxu0 0.0
        %1561 = vmatpush1.msra.mxu0 0.0
        %1562 = vmatprep.subr.mxu0 0.0
        %1563 = vmatpush1.msra.mxu0 0.0
        %1564 = vmatprep.mubr.f32.mxu0 0.0
        %v1565 = vand.u32 %v1159, 4294901760
        %1566 = vmatmul.mubr.f32.gmra.mrb[0].mxu0 %v1565
        %v1567 = vpop.f32.mrb[0].mxu0
        %v1568 = vadd.f32 %v1485, %v1567
        %v1569 = vpop.f32.mrb[0].mxu0
        %1570 = vdwg.mxu0
        %1571 = vmatprep.subr.mxu0 0.0
        %v1572 = vand.u32 %v1146, 4294901760
        %1573 = vmatpush1.msra.mxu0 %v1572
        %1574 = vmatprep.subr.mxu0 0.0
        %v1575 = vand.u32 %v1147, 4294901760
        %1576 = vmatpush1.msra.mxu0 %v1575
        %1577 = vmatprep.subr.mxu0 0.0
        %v1578 = vand.u32 %v1148, 4294901760
        %1579 = vmatpush1.msra.mxu0 %v1578
        %1580 = vmatprep.subr.mxu0 0.0
        %v1581 = vand.u32 %v1149, 4294901760
        %1582 = vmatpush1.msra.mxu0 %v1581
        %1583 = vmatprep.subr.mxu0 0.0
        %1584 = vmatpush1.msra.mxu0 0.0
        %1585 = vmatprep.subr.mxu0 0.0
        %1586 = vmatpush1.msra.mxu0 0.0
        %1587 = vmatprep.subr.mxu0 0.0
        %1588 = vmatpush1.msra.mxu0 0.0
        %1589 = vmatprep.subr.mxu0 0.0
        %1590 = vmatpush1.msra.mxu0 0.0
        %1591 = vmatprep.subr.mxu0 0.0
        %1592 = vmatpush1.msra.mxu0 0.0
        %1593 = vmatprep.subr.mxu0 0.0
        %1594 = vmatpush1.msra.mxu0 0.0
        %1595 = vmatprep.subr.mxu0 0.0
        %1596 = vmatpush1.msra.mxu0 0.0
        %1597 = vmatprep.subr.mxu0 0.0
        %1598 = vmatpush1.msra.mxu0 0.0
        %1599 = vmatprep.subr.mxu0 0.0
        %1600 = vmatpush1.msra.mxu0 0.0
        %1601 = vmatprep.subr.mxu0 0.0
        %1602 = vmatpush1.msra.mxu0 0.0
        %1603 = vmatprep.subr.mxu0 0.0
        %1604 = vmatpush1.msra.mxu0 0.0
        %1605 = vmatprep.subr.mxu0 0.0
        %1606 = vmatpush1.msra.mxu0 0.0
        %1607 = vmatprep.subr.mxu0 0.0
        %1608 = vmatpush1.msra.mxu0 0.0
        %1609 = vmatprep.subr.mxu0 0.0
        %1610 = vmatpush1.msra.mxu0 0.0
        %1611 = vmatprep.subr.mxu0 0.0
        %1612 = vmatpush1.msra.mxu0 0.0
        %1613 = vmatprep.subr.mxu0 0.0
        %1614 = vmatpush1.msra.mxu0 0.0
        %1615 = vmatprep.subr.mxu0 0.0
        %1616 = vmatpush1.msra.mxu0 0.0
        %1617 = vmatprep.subr.mxu0 0.0
        %1618 = vmatpush1.msra.mxu0 0.0
        %1619 = vmatprep.subr.mxu0 0.0
        %1620 = vmatpush1.msra.mxu0 0.0
        %1621 = vmatprep.subr.mxu0 0.0
        %1622 = vmatpush1.msra.mxu0 0.0
        %1623 = vmatprep.subr.mxu0 0.0
        %1624 = vmatpush1.msra.mxu0 0.0
        %1625 = vmatprep.subr.mxu0 0.0
        %1626 = vmatpush1.msra.mxu0 0.0
        %1627 = vmatprep.subr.mxu0 0.0
        %1628 = vmatpush1.msra.mxu0 0.0
        %1629 = vmatprep.subr.mxu0 0.0
        %1630 = vmatpush1.msra.mxu0 0.0
        %1631 = vmatprep.subr.mxu0 0.0
        %1632 = vmatpush1.msra.mxu0 0.0
        %1633 = vmatprep.subr.mxu0 0.0
        %1634 = vmatpush1.msra.mxu0 0.0
        %1635 = vmatprep.subr.mxu0 0.0
        %1636 = vmatpush1.msra.mxu0 0.0
        %1637 = vmatprep.subr.mxu0 0.0
        %1638 = vmatpush1.msra.mxu0 0.0
        %1639 = vmatprep.mubr.f32.mxu0 0.0
        %v1640 = vand.u32 %v1159, 4294901760
        %1641 = vmatmul.mubr.f32.gmra.mrb[0].mxu0 %v1640
        %v1642 = vpop.f32.mrb[0].mxu0
        %v1643 = vadd.f32 %v1568, %v1642
        %v1644 = vpop.f32.mrb[0].mxu0
        %1645 = vdwg.mxu0
        %vm1646 = vcmask 64512
        %1647 = vst.msk [vmem:[%s291] sm:$0xff] %vm1646, %v1643
        %s1648 = sand.u32 %s182, 1
        %s1649 = scalar_lea.sflag [#allocation3], %s1648
        %s1650 = sand.u32 %s182, 1
        %s1651 = smul.addr %s1650, 8
        %s1652 = scalar_lea.vmem [#allocation2], %s1651
        // Predicated region
        $region45: #{tpu_custom_call.1} parent=43 // pred_check
          %p1653 = pneg %p192
        $region46: #{tpu_custom_call.1} parent=43 // pred_check_branch
          %1655 = sbr.rel (%p1653) target = $region48
        $region47: #{tpu_custom_call.1} parent=43 // pred_region
          %s1657 = ssub.s32 128, 128
          %1658 = vsyncadd %s1649, %s1657
          %s1659 = sadd.s32 %s25, %s24
          %s1660 = smul.addr %s1659, 128
          %s1661 = scalar_lea.hbm %s6, %s1660
          %s1663 = sshll.u32 %s1652, 4
          %s1664 = int_to_ptr.vmem [resolvable:$true] %s1663
          %1666 = dma.vmem_to_hbm [thread:$0]  %s1664, 128, %s1661, %s1649
        $region48: #{tpu_custom_call.1} parent=43 // pred_fallthru
          _
      $region44: #{tpu_custom_call.1} parent=5 // pred_fallthru
        _
      %p1667 = scmp.le.s32.totalorder 2, %s15
      // Predicated region
      $region49: #{tpu_custom_call.1} parent=5 // pred_check
        %p1668 = pneg %p1667
      $region50: #{tpu_custom_call.1} parent=5 // pred_check_branch
        %1670 = sbr.rel (%p1668) target = $region52
      $region51: #{tpu_custom_call.1} parent=5 // pred_region
        %s1671 = ssub.s32 %s15, 2
        // Predicated region
        $region53: #{tpu_custom_call.1} parent=51 // pred_check
          %p1672 = pneg %p198
        $region54: #{tpu_custom_call.1} parent=51 // pred_check_branch
          %1674 = sbr.rel (%p1672) target = $region56
        $region55: #{tpu_custom_call.1} parent=51 // pred_region
          %s1675 = sand.u32 %s183, 1
          %s1676 = scalar_lea.sflag [#allocation3], %s1675
          %s1677 = sand.u32 %s183, 1
          %s1678 = smul.addr %s1677, 8
          %s1679 = scalar_lea.vmem [#allocation2], %s1678
          %1680 = dma.done %s1676, 128
        $region56: #{tpu_custom_call.1} parent=51 // pred_fallthru
          _
      $region52: #{tpu_custom_call.1} parent=5 // pred_fallthru
        _
    $region6: #{tpu_custom_call.1} parent=1 // loop_footer
      %s19 = sadd.s32 1, %s15
    $region7: #{tpu_custom_call.1} parent=1 // loop_footer_branch
      %14 = sbr.rel target = $region3
    $region8: #{tpu_custom_call.1} parent=1 // loop_exit
      _
    %1681 = vsyncpa [#allocation3], 1
    %s1682 = scalar_lea.sflag [#allocation3], 1
    %1683 = vsyncpa %s1682, 1

</llo_original>
